<compile_context>
chip_gen: v7x
topology: tpu7x:2x2x1
jax: 0.10.0
libtpu: 0.0.40
codegen_flags: <defaults>
</compile_context>

<pallas_src>
import jax
import jax.numpy as jnp
from jax.experimental import pallas as pl
from jax.experimental.pallas import tpu as pltpu


def _round_up(a, b):
    return (a + b - 1) // b * b


def _bn_fold(bn_params):
    g, beta, mean, var = bn_params
    s = g / jnp.sqrt(var + 1e-5)
    return s, beta - mean * s


def fuse_view_pallas(x, pos_2d, params, *, matmul_dtype=jnp.float32):
    """x: (B, T, J, c, N)   pos_2d: (B, T, J, >=2, N)   ->  (B, T, J, c, N)."""
    B, T, J, c, N = x.shape
    C = J * c
    C2 = 2 * C
    J2 = 2 * J
    M = B * T

    # ---- pick TM (positions per grid step, lane axis) from a VMEM budget ----
    # Rough live f32 bytes per unit of TM inside one step (flipped orientation),
    # double-buffered inputs/outputs included.
    per_tm = 4 * (
        2 * N * (_round_up(C, 8) + _round_up(J2, 8))       # f / p input blocks (x2 bufs)
        + N * (2 * C2 + 2 * C) + 2 * N * C2                # g, q, q+pos_b
        + N * N * (4 * C2 + C + 8)                         # h, u, t, ag, att
        + 2 * _round_up(N * C, 8))                         # output block (x2 bufs)
    budget = 16 << 20          # headroom under v7x's 32 MiB scoped VMEM default
    TM = 512
    while TM > 128 and TM * per_tm > budget:
        TM //= 2
    while TM > 128 and -(-M // TM) < 2:                    # >=2 grid steps -> both v7x TCs busy
        TM //= 2
    Mp = _round_up(M, TM)
    grid = (Mp // TM,)

    # ---- layout plumbing: channels on sublanes, positions lane-dense ----
    f_nm = jnp.transpose(x, (4, 2, 3, 0, 1)).reshape(N, C, M).astype(jnp.float32)
    p_nm = jnp.transpose(pos_2d[:, :, :, :2, :], (4, 2, 3, 0, 1)
                         ).reshape(N, J2, M).astype(jnp.float32)
    if Mp != M:
        f_nm = jnp.pad(f_nm, ((0, 0), (0, 0), (0, Mp - M)))
        p_nm = jnp.pad(p_nm, ((0, 0), (0, 0), (0, Mp - M)))

    # ---- fold eval-mode BN into weights, fuse same-input matmuls ----
    s_e, sh_e = _bn_fold(params['expand_bn'])
    s1, sh1 = _bn_fold(params['l1_bn'])
    s2, sh2 = _bn_fold(params['l2_bn'])
    s_ag, sh_ag = _bn_fold(params['ag_bn'])
    s_at, sh_at = _bn_fold(params['att_bn'])

    exp_ws = params['expand_w'] * s_e[:, None]             # (C2, 2C): cols [f(n1) | f(n2)]
    # one per-view weight: rows = [exp_top ; exp_bot ; W0^T ; W1^T]  -> (2*C2+2*C, C)
    w_pv = jnp.concatenate([exp_ws[:, :C], exp_ws[:, C:],
                            params['W'][0].T, params['W'][1].T], axis=0)
    w_pos = params['pos_w']                                # (C2, 2J)
    w1 = params['l1_w'] * s1[:, None]                      # (C2, C2)
    w2 = params['l2_w'] * s2[:, None]                      # (C2, C2)
    w_aa = jnp.concatenate([params['ag_w'] * s_ag[:, None],
                            params['att_w'] * s_at[:, None]], axis=0)   # (2*C2, C2)
    w_ags = params['ag_sw']                                # (C, C2)
    w_atts = params['att_sw'].reshape(C2, 1)               # column for the VPU/XLU reduction

    b_exp = sh_e.reshape(C2, 1)
    b_pos = params['pos_b'].reshape(C2, 1)
    b_c1 = sh1.reshape(C2, 1)
    b_c2 = sh2.reshape(C2, 1)
    b_aa = jnp.concatenate([sh_ag, sh_at]).reshape(2 * C2, 1)
    b_ag = params['ag_sb'].reshape(C, 1)
    b_att = params['att_sb'].reshape(1, 1)

    consts = [w_pv, w_pos, w1, w2, w_aa, w_ags, w_atts,
              b_exp, b_pos, b_c1, b_c2, b_aa, b_ag, b_att]
    consts = [cst.astype(jnp.float32) for cst in consts]

    mxu_dtype = matmul_dtype

    def kernel(f_ref, p_ref, wpv_ref, wpos_ref, w1_ref, w2_ref, waa_ref,
               wags_ref, watts_ref, bexp_ref, bpos_ref, bc1_ref, bc2_ref,
               baa_ref, bag_ref, batt_ref, out_ref):
        def mm(w, a):
            # small weight streams through the MXU as LHS; positions fill the lanes.
            return jnp.dot(w.astype(mxu_dtype), a.astype(mxu_dtype),
                           preferred_element_type=jnp.float32)

        def relu(z):
            return jnp.maximum(z, 0.0)

        def blk(z, i):                                     # 128-aligned lane slice
            return z[:, i * TM:(i + 1) * TM]

        # ----- per-view linear pieces: one fused matmul across all views -----
        f_views = [f_ref[n] for n in range(N)]             # each (C, TM)
        f_all = jnp.concatenate(f_views, axis=1)           # (C, N*TM)
        p_all = jnp.concatenate([p_ref[n] for n in range(N)], axis=1)

        g = mm(wpv_ref[...], f_all)                        # (2*C2+2*C, N*TM)
        a_all = g[:C2] + bexp_ref[...]                     # expand half for f[n1] (+BN shift)
        b_all = g[C2:2 * C2]                               # expand half for f[n2]
        fs_all = g[2 * C2:2 * C2 + C]                      # W0^T f  (self term)
        ft_all = g[2 * C2 + C:]                            # W1^T f  (transfer term)
        q_all = mm(wpos_ref[...], p_all)                   # (C2, N*TM)
        qp_all = q_all + bpos_ref[...]                     # pos bias folded once per view

        # ----- pair slab h, lanes ordered as (n1, n2, m) TM-wide blocks -----
        blocks = []
        for n1 in range(N):
            a1 = blk(a_all, n1)
            q1 = blk(qp_all, n1)
            for n2 in range(N):
                blocks.append(relu(a1 + blk(b_all, n2)) + (q1 - blk(q_all, n2)))
        h = jnp.concatenate(blocks, axis=1)                # (C2, N*N*TM)

        # ----- residual block of two (conv -> BN -> ReLU) -----
        u = relu(mm(w1_ref[...], h) + bc1_ref[...])
        u = relu(mm(w2_ref[...], u) + bc2_ref[...])
        h = h + u

        # ----- AgShrink / AttShrink heads (fused first conv, split shrinks) -----
        t = relu(mm(waa_ref[...], h) + baa_ref[...])       # (2*C2, N*N*TM)
        ag = mm(wags_ref[...], t[:C2]) + bag_ref[...]      # (C, N*N*TM)
        # 1-row att logit: f32 VPU multiply + sublane reduce (keeps MXU free).
        att = jnp.sum(t[C2:] * watts_ref[...], axis=0, keepdims=True) + batt_ref[...]

        # ----- fusion: per-(n1) stable softmax over n2 + weighted reduction -----
        outs = []
        for n1 in range(N):
            att_b = [blk(att, n1 * N + n2) for n2 in range(N)]   # each (1, TM)
            mx = att_b[0]
            for n2 in range(1, N):
                mx = jnp.maximum(mx, att_b[n2])
            num = None
            den = None
            for n2 in range(N):
                w_att = jnp.exp(att_b[n2] - mx)            # (1, TM), stable
                if n1 == n2:
                    fc = blk(fs_all, n2)                   # diagonal: E * f_self
                else:
                    fc = blk(ft_all, n2) * blk(ag, n1 * N + n2)  # (1-E) * f_tran * ag
                num = w_att * fc if num is None else num + w_att * fc
                den = w_att if den is None else den + w_att
            inv = pl.reciprocal(den, approx=True)
            inv = inv * (2.0 - den * inv)                  # one Newton step -> ~f32 accuracy
            outs.append(num * inv + f_views[n1])           # + residual f
        out_ref[...] = jnp.concatenate(outs, axis=0)       # (N*C, TM), lane-dense

    data_specs = [
        pl.BlockSpec((N, C, TM), lambda i: (0, 0, i)),
        pl.BlockSpec((N, J2, TM), lambda i: (0, 0, i)),
    ]
    const_specs = [pl.BlockSpec(cst.shape, lambda i: (0, 0)) for cst in consts]

    out_nm = pl.pallas_call(
        kernel,
        out_shape=jax.ShapeDtypeStruct((N * C, Mp), jnp.float32),
        grid=grid,
        in_specs=data_specs + const_specs,
        out_specs=pl.BlockSpec((N * C, TM), lambda i: (0, i)),
        compiler_params=pltpu.CompilerParams(
            dimension_semantics=("parallel",),
            vmem_limit_bytes=32 << 20),
    )(f_nm, p_nm, *consts)

    out = out_nm[:, :M].reshape(N, J, c, B, T)
    return jnp.transpose(out, (3, 4, 1, 2, 0)).astype(x.dtype)   # (B, T, J, c, N)


# ---------------- pure-JAX reference mirroring the PyTorch (NCHW) code ------
def fuse_view_reference(x_in, pos_2d, P):
    B, T, J, c, N = x_in.shape
    C = J * c
    NN = N * N
    x = jnp.transpose(x_in, (0, 2, 3, 1, 4)).reshape(B, C, T, N)   # b (j c) t n
    f = x
    x1 = jnp.broadcast_to(x[:, :, :, :, None], (B, C, T, N, N))
    x2 = jnp.broadcast_to(x[:, :, :, None, :], (B, C, T, N, N))
    xp = jnp.concatenate([x1, x2], axis=1).reshape(B, 2 * C, T, NN)

    p = jnp.transpose(pos_2d[:, :, :, :2, :], (0, 2, 3, 1, 4)).reshape(B, 2 * J, T, N)
    rel = (p[:, :, :, :, None] - p[:, :, :, None, :]).reshape(B, 2 * J, T, NN)

    def conv(z, w, b=None):
        y = jnp.einsum('oc,bcts->bots', w, z)
        if b is not None:
            y = y + b[None, :, None, None]
        return y

    def bn(z, prm):
        g, be, m, v = prm
        s = g / jnp.sqrt(v + 1e-5)
        return z * s[None, :, None, None] + (be - m * s)[None, :, None, None]

    relu = lambda z: jnp.maximum(z, 0.0)

    h = relu(bn(conv(xp, P['expand_w']), P['expand_bn']))
    h = h + conv(rel, P['pos_w'], P['pos_b'])
    res = h
    u = relu(bn(conv(h, P['l1_w']), P['l1_bn']))
    u = relu(bn(conv(u, P['l2_w']), P['l2_bn']))
    h = res + u

    ag = conv(relu(bn(conv(h, P['ag_w']), P['ag_bn'])), P['ag_sw'], P['ag_sb'])
    ag = ag.reshape(B, C, T, N, N)
    att = conv(relu(bn(conv(h, P['att_w']), P['att_bn'])), P['att_sw'], P['att_sb'])
    att = att.reshape(B, 1, T, N, N)

    f_self = jnp.einsum('bctn,cd->bdtn', f, P['W'][0])
    f_self = jnp.broadcast_to(f_self[:, :, :, None, :], (B, C, T, N, N))
    f_tran = jnp.einsum('bctn,cd->bdtn', f, P['W'][1])
    f_tran = jnp.broadcast_to(f_tran[:, :, :, None, :], (B, C, T, N, N)) * ag
    E = jnp.eye(N, dtype=jnp.float32).reshape(1, 1, 1, N, N)
    f_conv = E * f_self + (1.0 - E) * f_tran
    att = jax.nn.softmax(att, axis=-1)
    f_fuse = jnp.sum(f_conv * att, axis=-1) + f
    return jnp.transpose(f_fuse.reshape(B, J, c, T, N), (0, 3, 1, 2, 4))


def init_params(J, c, key):
    C = J * c
    C2 = 2 * C
    keys = iter(jax.random.split(key, 64))

    def w(shape, scale=0.2):
        return scale * jax.random.normal(next(keys), shape, dtype=jnp.float32)

    def bnp(n):
        g = 1.0 + 0.1 * jax.random.normal(next(keys), (n,), dtype=jnp.float32)
        be = 0.1 * jax.random.normal(next(keys), (n,), dtype=jnp.float32)
        m = 0.1 * jax.random.normal(next(keys), (n,), dtype=jnp.float32)
        v = 1.0 + 0.1 * jnp.abs(jax.random.normal(next(keys), (n,), dtype=jnp.float32))
        return (g, be, m, v)

    return {
        'expand_w': w((C2, C2)), 'expand_bn': bnp(C2),
        'pos_w': w((C2, 2 * J)), 'pos_b': w((C2,)),
        'l1_w': w((C2, C2)), 'l1_bn': bnp(C2),
        'l2_w': w((C2, C2)), 'l2_bn': bnp(C2),
        'ag_w': w((C2, C2)), 'ag_bn': bnp(C2),
        'ag_sw': w((C, C2)), 'ag_sb': w((C,)),
        'att_w': w((C2, C2)), 'att_bn': bnp(C2),
        'att_sw': w((1, C2)), 'att_sb': w((1,)),
        'W': w((2, C, C), scale=0.5),   # xavier-style init stand-in
    }


if __name__ == "__main__":
    key = jax.random.PRNGKey(0)

    def run_case(B, T, J, c, N, matmul_dtype=jnp.float32, tol=1e-3):
        kx, kp, kw = jax.random.split(jax.random.fold_in(key, B * 1000 + T * 10 + N), 3)
        x = jax.random.normal(kx, (B, T, J, c, N), dtype=jnp.float32)
        pos_2d = jax.random.normal(kp, (B, T, J, 3, N), dtype=jnp.float32)
        params = init_params(J, c, kw)
        out = jax.block_until_ready(
            fuse_view_pallas(x, pos_2d, params, matmul_dtype=matmul_dtype))
        ref = jax.block_until_ready(fuse_view_reference(x, pos_2d, params))
        assert out.shape == (B, T, J, c, N), out.shape
        err = float(jnp.max(jnp.abs(out - ref)))
        assert err < tol, f"max abs err {err} for case {(B, T, J, c, N, matmul_dtype)}"

    # single-block case (N=2), odd view count (N=3), and a multi-block case
    # (M=260 -> TM=256, grid=2, lane padding) exercising the pipelined path.
    run_case(2, 4, 4, 2, 2)
    run_case(2, 9, 4, 2, 3)
    run_case(2, 130, 4, 2, 2)
    # bf16 MXU operands with f32 accumulation: functional smoke check with a
    # loose bound; must be re-validated at production channel widths.
    run_case(2, 9, 4, 2, 3, matmul_dtype=jnp.bfloat16, tol=0.3)
    print("KERNEL_OK")
</pallas_src>

<mosaic_0001>
module attributes {stable_mosaic.version = 11 : i64} {
  func.func @kernel(%arg0: i32, %arg1: memref<2x8x128xf32, #tpu.memory_space<vmem>>, %arg2: memref<2x8x128xf32, #tpu.memory_space<vmem>>, %arg3: memref<48x8xf32, #tpu.memory_space<vmem>>, %arg4: memref<16x8xf32, #tpu.memory_space<vmem>>, %arg5: memref<16x16xf32, #tpu.memory_space<vmem>>, %arg6: memref<16x16xf32, #tpu.memory_space<vmem>>, %arg7: memref<32x16xf32, #tpu.memory_space<vmem>>, %arg8: memref<8x16xf32, #tpu.memory_space<vmem>>, %arg9: memref<16x1xf32, #tpu.memory_space<vmem>>, %arg10: memref<16x1xf32, #tpu.memory_space<vmem>>, %arg11: memref<16x1xf32, #tpu.memory_space<vmem>>, %arg12: memref<16x1xf32, #tpu.memory_space<vmem>>, %arg13: memref<16x1xf32, #tpu.memory_space<vmem>>, %arg14: memref<32x1xf32, #tpu.memory_space<vmem>>, %arg15: memref<8x1xf32, #tpu.memory_space<vmem>>, %arg16: memref<1x1xf32, #tpu.memory_space<vmem>>, %arg17: memref<16x128xf32, #tpu.memory_space<vmem>>) attributes {dimension_semantics = [#tpu.dimension_semantics<parallel>], iteration_bounds = array<i64: 1>, scalar_prefetch = 0 : i64, scratch_operands = 0 : i64, tpu.core_type = #tpu.core_type<tc>, window_params = [{transform_indices = @transform_0, window_bounds = array<i64: 2, 8, 128>}, {transform_indices = @transform_1, window_bounds = array<i64: 2, 8, 128>}, {pipeline_mode = #tpu.pipeline_mode<synchronous>, transform_indices = @transform_2, window_bounds = array<i64: 48, 8>}, {pipeline_mode = #tpu.pipeline_mode<synchronous>, transform_indices = @transform_3, window_bounds = array<i64: 16, 8>}, {pipeline_mode = #tpu.pipeline_mode<synchronous>, transform_indices = @transform_4, window_bounds = array<i64: 16, 16>}, {pipeline_mode = #tpu.pipeline_mode<synchronous>, transform_indices = @transform_5, window_bounds = array<i64: 16, 16>}, {pipeline_mode = #tpu.pipeline_mode<synchronous>, transform_indices = @transform_6, window_bounds = array<i64: 32, 16>}, {pipeline_mode = #tpu.pipeline_mode<synchronous>, transform_indices = @transform_7, window_bounds = array<i64: 8, 16>}, {pipeline_mode = #tpu.pipeline_mode<synchronous>, transform_indices = @transform_8, window_bounds = array<i64: 16, 1>}, {pipeline_mode = #tpu.pipeline_mode<synchronous>, transform_indices = @transform_9, window_bounds = array<i64: 16, 1>}, {pipeline_mode = #tpu.pipeline_mode<synchronous>, transform_indices = @transform_10, window_bounds = array<i64: 16, 1>}, {pipeline_mode = #tpu.pipeline_mode<synchronous>, transform_indices = @transform_11, window_bounds = array<i64: 16, 1>}, {pipeline_mode = #tpu.pipeline_mode<synchronous>, transform_indices = @transform_12, window_bounds = array<i64: 16, 1>}, {pipeline_mode = #tpu.pipeline_mode<synchronous>, transform_indices = @transform_13, window_bounds = array<i64: 32, 1>}, {pipeline_mode = #tpu.pipeline_mode<synchronous>, transform_indices = @transform_14, window_bounds = array<i64: 8, 1>}, {pipeline_mode = #tpu.pipeline_mode<synchronous>, transform_indices = @transform_15, window_bounds = array<i64: 1, 1>}, {transform_indices = @transform_16, window_bounds = array<i64: 16, 128>}]} {
    %c0 = arith.constant 0 : index
    %c0_0 = arith.constant 0 : index
    %c0_1 = arith.constant 0 : index
    %0 = vector.load %arg1[%c0, %c0_0, %c0_1] : memref<2x8x128xf32, #tpu.memory_space<vmem>>, vector<1x8x128xf32>
    %1 = vector.shape_cast %0 : vector<1x8x128xf32> to vector<8x128xf32>
    %c1 = arith.constant 1 : index
    %c0_2 = arith.constant 0 : index
    %c0_3 = arith.constant 0 : index
    %2 = vector.load %arg1[%c1, %c0_2, %c0_3] : memref<2x8x128xf32, #tpu.memory_space<vmem>>, vector<1x8x128xf32>
    %3 = vector.shape_cast %2 : vector<1x8x128xf32> to vector<8x128xf32>
    %4 = tpu.concatenate %1, %3 in 1 : vector<8x128xf32>, vector<8x128xf32> -> vector<8x256xf32>
    %c0_4 = arith.constant 0 : index
    %c0_5 = arith.constant 0 : index
    %c0_6 = arith.constant 0 : index
    %5 = vector.load %arg2[%c0_4, %c0_5, %c0_6] : memref<2x8x128xf32, #tpu.memory_space<vmem>>, vector<1x8x128xf32>
    %6 = vector.shape_cast %5 : vector<1x8x128xf32> to vector<8x128xf32>
    %c1_7 = arith.constant 1 : index
    %c0_8 = arith.constant 0 : index
    %c0_9 = arith.constant 0 : index
    %7 = vector.load %arg2[%c1_7, %c0_8, %c0_9] : memref<2x8x128xf32, #tpu.memory_space<vmem>>, vector<1x8x128xf32>
    %8 = vector.shape_cast %7 : vector<1x8x128xf32> to vector<8x128xf32>
    %9 = tpu.concatenate %6, %8 in 1 : vector<8x128xf32>, vector<8x128xf32> -> vector<8x256xf32>
    %c0_10 = arith.constant 0 : index
    %c0_11 = arith.constant 0 : index
    %10 = vector.load %arg3[%c0_10, %c0_11] : memref<48x8xf32, #tpu.memory_space<vmem>>, vector<48x8xf32>
    %cst = arith.constant dense<0.000000e+00> : vector<48x256xf32>
    %11 = tpu.matmul %10, %4, %cst {dimension_numbers = #tpu.dot_dimension_numbers<[1], [0], [0], [1], [0, 0, 1, 1], [], []>} : vector<48x8xf32>, vector<8x256xf32>, vector<48x256xf32> -> vector<48x256xf32>
    %12 = vector.extract_strided_slice %11 {offsets = [0, 0], sizes = [16, 256], strides = [1, 1]} : vector<48x256xf32> to vector<16x256xf32>
    %c0_12 = arith.constant 0 : index
    %c0_13 = arith.constant 0 : index
    %13 = vector.load %arg10[%c0_12, %c0_13] : memref<16x1xf32, #tpu.memory_space<vmem>>, vector<16x1xf32>
    %14 = vector.broadcast %13 : vector<16x1xf32> to vector<16x256xf32>
    %15 = arith.addf %12, %14 : vector<16x256xf32>
    %16 = vector.extract_strided_slice %11 {offsets = [16, 0], sizes = [16, 256], strides = [1, 1]} : vector<48x256xf32> to vector<16x256xf32>
    %17 = vector.extract_strided_slice %11 {offsets = [32, 0], sizes = [8, 256], strides = [1, 1]} : vector<48x256xf32> to vector<8x256xf32>
    %18 = vector.extract_strided_slice %11 {offsets = [40, 0], sizes = [8, 256], strides = [1, 1]} : vector<48x256xf32> to vector<8x256xf32>
    %c0_14 = arith.constant 0 : index
    %c0_15 = arith.constant 0 : index
    %19 = vector.load %arg4[%c0_14, %c0_15] : memref<16x8xf32, #tpu.memory_space<vmem>>, vector<16x8xf32>
    %cst_16 = arith.constant dense<0.000000e+00> : vector<16x256xf32>
    %20 = tpu.matmul %19, %9, %cst_16 {dimension_numbers = #tpu.dot_dimension_numbers<[1], [0], [0], [1], [0, 0, 1, 1], [], []>} : vector<16x8xf32>, vector<8x256xf32>, vector<16x256xf32> -> vector<16x256xf32>
    %c0_17 = arith.constant 0 : index
    %c0_18 = arith.constant 0 : index
    %21 = vector.load %arg11[%c0_17, %c0_18] : memref<16x1xf32, #tpu.memory_space<vmem>>, vector<16x1xf32>
    %22 = vector.broadcast %21 : vector<16x1xf32> to vector<16x256xf32>
    %23 = arith.addf %20, %22 : vector<16x256xf32>
    %24 = vector.extract_strided_slice %15 {offsets = [0, 0], sizes = [16, 128], strides = [1, 1]} : vector<16x256xf32> to vector<16x128xf32>
    %25 = vector.extract_strided_slice %23 {offsets = [0, 0], sizes = [16, 128], strides = [1, 1]} : vector<16x256xf32> to vector<16x128xf32>
    %26 = vector.extract_strided_slice %16 {offsets = [0, 0], sizes = [16, 128], strides = [1, 1]} : vector<16x256xf32> to vector<16x128xf32>
    %27 = arith.addf %24, %26 : vector<16x128xf32>
    %cst_19 = arith.constant 0.000000e+00 : f32
    %28 = vector.broadcast %cst_19 : f32 to vector<16x128xf32>
    %29 = arith.maximumf %27, %28 : vector<16x128xf32>
    %30 = vector.extract_strided_slice %20 {offsets = [0, 0], sizes = [16, 128], strides = [1, 1]} : vector<16x256xf32> to vector<16x128xf32>
    %31 = arith.subf %25, %30 : vector<16x128xf32>
    %32 = arith.addf %29, %31 : vector<16x128xf32>
    %33 = vector.extract_strided_slice %16 {offsets = [0, 128], sizes = [16, 128], strides = [1, 1]} : vector<16x256xf32> to vector<16x128xf32>
    %34 = arith.addf %24, %33 : vector<16x128xf32>
    %cst_20 = arith.constant 0.000000e+00 : f32
    %35 = vector.broadcast %cst_20 : f32 to vector<16x128xf32>
    %36 = arith.maximumf %34, %35 : vector<16x128xf32>
    %37 = vector.extract_strided_slice %20 {offsets = [0, 128], sizes = [16, 128], strides = [1, 1]} : vector<16x256xf32> to vector<16x128xf32>
    %38 = arith.subf %25, %37 : vector<16x128xf32>
    %39 = arith.addf %36, %38 : vector<16x128xf32>
    %40 = vector.extract_strided_slice %15 {offsets = [0, 128], sizes = [16, 128], strides = [1, 1]} : vector<16x256xf32> to vector<16x128xf32>
    %41 = vector.extract_strided_slice %23 {offsets = [0, 128], sizes = [16, 128], strides = [1, 1]} : vector<16x256xf32> to vector<16x128xf32>
    %42 = vector.extract_strided_slice %16 {offsets = [0, 0], sizes = [16, 128], strides = [1, 1]} : vector<16x256xf32> to vector<16x128xf32>
    %43 = arith.addf %40, %42 : vector<16x128xf32>
    %cst_21 = arith.constant 0.000000e+00 : f32
    %44 = vector.broadcast %cst_21 : f32 to vector<16x128xf32>
    %45 = arith.maximumf %43, %44 : vector<16x128xf32>
    %46 = vector.extract_strided_slice %20 {offsets = [0, 0], sizes = [16, 128], strides = [1, 1]} : vector<16x256xf32> to vector<16x128xf32>
    %47 = arith.subf %41, %46 : vector<16x128xf32>
    %48 = arith.addf %45, %47 : vector<16x128xf32>
    %49 = vector.extract_strided_slice %16 {offsets = [0, 128], sizes = [16, 128], strides = [1, 1]} : vector<16x256xf32> to vector<16x128xf32>
    %50 = arith.addf %40, %49 : vector<16x128xf32>
    %cst_22 = arith.constant 0.000000e+00 : f32
    %51 = vector.broadcast %cst_22 : f32 to vector<16x128xf32>
    %52 = arith.maximumf %50, %51 : vector<16x128xf32>
    %53 = vector.extract_strided_slice %20 {offsets = [0, 128], sizes = [16, 128], strides = [1, 1]} : vector<16x256xf32> to vector<16x128xf32>
    %54 = arith.subf %41, %53 : vector<16x128xf32>
    %55 = arith.addf %52, %54 : vector<16x128xf32>
    %56 = tpu.concatenate %32, %39, %48, %55 in 1 : vector<16x128xf32>, vector<16x128xf32>, vector<16x128xf32>, vector<16x128xf32> -> vector<16x512xf32>
    %c0_23 = arith.constant 0 : index
    %c0_24 = arith.constant 0 : index
    %57 = vector.load %arg5[%c0_23, %c0_24] : memref<16x16xf32, #tpu.memory_space<vmem>>, vector<16x16xf32>
    %cst_25 = arith.constant dense<0.000000e+00> : vector<16x512xf32>
    %58 = tpu.matmul %57, %56, %cst_25 {dimension_numbers = #tpu.dot_dimension_numbers<[1], [0], [0], [1], [0, 0, 1, 1], [], []>} : vector<16x16xf32>, vector<16x512xf32>, vector<16x512xf32> -> vector<16x512xf32>
    %c0_26 = arith.constant 0 : index
    %c0_27 = arith.constant 0 : index
    %59 = vector.load %arg12[%c0_26, %c0_27] : memref<16x1xf32, #tpu.memory_space<vmem>>, vector<16x1xf32>
    %60 = vector.broadcast %59 : vector<16x1xf32> to vector<16x512xf32>
    %61 = arith.addf %58, %60 : vector<16x512xf32>
    %cst_28 = arith.constant 0.000000e+00 : f32
    %62 = vector.broadcast %cst_28 : f32 to vector<16x512xf32>
    %63 = arith.maximumf %61, %62 : vector<16x512xf32>
    %c0_29 = arith.constant 0 : index
    %c0_30 = arith.constant 0 : index
    %64 = vector.load %arg6[%c0_29, %c0_30] : memref<16x16xf32, #tpu.memory_space<vmem>>, vector<16x16xf32>
    %cst_31 = arith.constant dense<0.000000e+00> : vector<16x512xf32>
    %65 = tpu.matmul %64, %63, %cst_31 {dimension_numbers = #tpu.dot_dimension_numbers<[1], [0], [0], [1], [0, 0, 1, 1], [], []>} : vector<16x16xf32>, vector<16x512xf32>, vector<16x512xf32> -> vector<16x512xf32>
    %c0_32 = arith.constant 0 : index
    %c0_33 = arith.constant 0 : index
    %66 = vector.load %arg13[%c0_32, %c0_33] : memref<16x1xf32, #tpu.memory_space<vmem>>, vector<16x1xf32>
    %67 = vector.broadcast %66 : vector<16x1xf32> to vector<16x512xf32>
    %68 = arith.addf %65, %67 : vector<16x512xf32>
    %cst_34 = arith.constant 0.000000e+00 : f32
    %69 = vector.broadcast %cst_34 : f32 to vector<16x512xf32>
    %70 = arith.maximumf %68, %69 : vector<16x512xf32>
    %71 = arith.addf %56, %70 : vector<16x512xf32>
    %c0_35 = arith.constant 0 : index
    %c0_36 = arith.constant 0 : index
    %72 = vector.load %arg7[%c0_35, %c0_36] : memref<32x16xf32, #tpu.memory_space<vmem>>, vector<32x16xf32>
    %cst_37 = arith.constant dense<0.000000e+00> : vector<32x512xf32>
    %73 = tpu.matmul %72, %71, %cst_37 {dimension_numbers = #tpu.dot_dimension_numbers<[1], [0], [0], [1], [0, 0, 1, 1], [], []>} : vector<32x16xf32>, vector<16x512xf32>, vector<32x512xf32> -> vector<32x512xf32>
    %c0_38 = arith.constant 0 : index
    %c0_39 = arith.constant 0 : index
    %74 = vector.load %arg14[%c0_38, %c0_39] : memref<32x1xf32, #tpu.memory_space<vmem>>, vector<32x1xf32>
    %75 = vector.broadcast %74 : vector<32x1xf32> to vector<32x512xf32>
    %76 = arith.addf %73, %75 : vector<32x512xf32>
    %cst_40 = arith.constant 0.000000e+00 : f32
    %77 = vector.broadcast %cst_40 : f32 to vector<32x512xf32>
    %78 = arith.maximumf %76, %77 : vector<32x512xf32>
    %c0_41 = arith.constant 0 : index
    %c0_42 = arith.constant 0 : index
    %79 = vector.load %arg8[%c0_41, %c0_42] : memref<8x16xf32, #tpu.memory_space<vmem>>, vector<8x16xf32>
    %80 = vector.extract_strided_slice %78 {offsets = [0, 0], sizes = [16, 512], strides = [1, 1]} : vector<32x512xf32> to vector<16x512xf32>
    %cst_43 = arith.constant dense<0.000000e+00> : vector<8x512xf32>
    %81 = tpu.matmul %79, %80, %cst_43 {dimension_numbers = #tpu.dot_dimension_numbers<[1], [0], [0], [1], [0, 0, 1, 1], [], []>} : vector<8x16xf32>, vector<16x512xf32>, vector<8x512xf32> -> vector<8x512xf32>
    %c0_44 = arith.constant 0 : index
    %c0_45 = arith.constant 0 : index
    %82 = vector.load %arg15[%c0_44, %c0_45] : memref<8x1xf32, #tpu.memory_space<vmem>>, vector<8x1xf32>
    %83 = vector.broadcast %82 : vector<8x1xf32> to vector<8x512xf32>
    %84 = arith.addf %81, %83 : vector<8x512xf32>
    %85 = vector.extract_strided_slice %78 {offsets = [16, 0], sizes = [16, 512], strides = [1, 1]} : vector<32x512xf32> to vector<16x512xf32>
    %c0_46 = arith.constant 0 : index
    %c0_47 = arith.constant 0 : index
    %86 = vector.load %arg9[%c0_46, %c0_47] : memref<16x1xf32, #tpu.memory_space<vmem>>, vector<16x1xf32>
    %87 = vector.broadcast %86 : vector<16x1xf32> to vector<16x512xf32>
    %88 = arith.mulf %85, %87 : vector<16x512xf32>
    %cst_48 = arith.constant dense<0.000000e+00> : vector<512xf32>
    %89 = vector.multi_reduction <add>, %88, %cst_48 [0] : vector<16x512xf32> to vector<512xf32>
    %90 = vector.shape_cast %89 : vector<512xf32> to vector<1x512xf32>
    %c0_49 = arith.constant 0 : index
    %c0_50 = arith.constant 0 : index
    %91 = vector.load %arg16[%c0_49, %c0_50] : memref<1x1xf32, #tpu.memory_space<vmem>>, vector<1x1xf32>
    %92 = vector.broadcast %91 : vector<1x1xf32> to vector<1x512xf32>
    %93 = arith.addf %90, %92 : vector<1x512xf32>
    %94 = vector.extract_strided_slice %93 {offsets = [0, 0], sizes = [1, 128], strides = [1, 1]} : vector<1x512xf32> to vector<1x128xf32>
    %95 = vector.extract_strided_slice %93 {offsets = [0, 128], sizes = [1, 128], strides = [1, 1]} : vector<1x512xf32> to vector<1x128xf32>
    %96 = arith.maximumf %94, %95 : vector<1x128xf32>
    %97 = arith.subf %94, %96 : vector<1x128xf32>
    %98 = math.exp %97 : vector<1x128xf32>
    %99 = vector.extract_strided_slice %17 {offsets = [0, 0], sizes = [8, 128], strides = [1, 1]} : vector<8x256xf32> to vector<8x128xf32>
    %100 = vector.broadcast %98 : vector<1x128xf32> to vector<8x128xf32>
    %101 = arith.mulf %100, %99 : vector<8x128xf32>
    %102 = arith.subf %95, %96 : vector<1x128xf32>
    %103 = math.exp %102 : vector<1x128xf32>
    %104 = vector.extract_strided_slice %18 {offsets = [0, 128], sizes = [8, 128], strides = [1, 1]} : vector<8x256xf32> to vector<8x128xf32>
    %105 = vector.extract_strided_slice %84 {offsets = [0, 128], sizes = [8, 128], strides = [1, 1]} : vector<8x512xf32> to vector<8x128xf32>
    %106 = arith.mulf %104, %105 : vector<8x128xf32>
    %107 = vector.broadcast %103 : vector<1x128xf32> to vector<8x128xf32>
    %108 = arith.mulf %107, %106 : vector<8x128xf32>
    %109 = arith.addf %101, %108 : vector<8x128xf32>
    %110 = arith.addf %98, %103 : vector<1x128xf32>
    %111 = tpu.reciprocal %110 {approx = true} : vector<1x128xf32> -> vector<1x128xf32>
    %112 = arith.mulf %110, %111 : vector<1x128xf32>
    %cst_51 = arith.constant 2.000000e+00 : f32
    %113 = vector.broadcast %cst_51 : f32 to vector<1x128xf32>
    %114 = arith.subf %113, %112 : vector<1x128xf32>
    %115 = arith.mulf %111, %114 : vector<1x128xf32>
    %116 = vector.broadcast %115 : vector<1x128xf32> to vector<8x128xf32>
    %117 = arith.mulf %109, %116 : vector<8x128xf32>
    %118 = arith.addf %117, %1 : vector<8x128xf32>
    %119 = vector.extract_strided_slice %93 {offsets = [0, 256], sizes = [1, 128], strides = [1, 1]} : vector<1x512xf32> to vector<1x128xf32>
    %120 = vector.extract_strided_slice %93 {offsets = [0, 384], sizes = [1, 128], strides = [1, 1]} : vector<1x512xf32> to vector<1x128xf32>
    %121 = arith.maximumf %119, %120 : vector<1x128xf32>
    %122 = arith.subf %119, %121 : vector<1x128xf32>
    %123 = math.exp %122 : vector<1x128xf32>
    %124 = vector.extract_strided_slice %18 {offsets = [0, 0], sizes = [8, 128], strides = [1, 1]} : vector<8x256xf32> to vector<8x128xf32>
    %125 = vector.extract_strided_slice %84 {offsets = [0, 256], sizes = [8, 128], strides = [1, 1]} : vector<8x512xf32> to vector<8x128xf32>
    %126 = arith.mulf %124, %125 : vector<8x128xf32>
    %127 = vector.broadcast %123 : vector<1x128xf32> to vector<8x128xf32>
    %128 = arith.mulf %127, %126 : vector<8x128xf32>
    %129 = arith.subf %120, %121 : vector<1x128xf32>
    %130 = math.exp %129 : vector<1x128xf32>
    %131 = vector.extract_strided_slice %17 {offsets = [0, 128], sizes = [8, 128], strides = [1, 1]} : vector<8x256xf32> to vector<8x128xf32>
    %132 = vector.broadcast %130 : vector<1x128xf32> to vector<8x128xf32>
    %133 = arith.mulf %132, %131 : vector<8x128xf32>
    %134 = arith.addf %128, %133 : vector<8x128xf32>
    %135 = arith.addf %123, %130 : vector<1x128xf32>
    %136 = tpu.reciprocal %135 {approx = true} : vector<1x128xf32> -> vector<1x128xf32>
    %137 = arith.mulf %135, %136 : vector<1x128xf32>
    %cst_52 = arith.constant 2.000000e+00 : f32
    %138 = vector.broadcast %cst_52 : f32 to vector<1x128xf32>
    %139 = arith.subf %138, %137 : vector<1x128xf32>
    %140 = arith.mulf %136, %139 : vector<1x128xf32>
    %141 = vector.broadcast %140 : vector<1x128xf32> to vector<8x128xf32>
    %142 = arith.mulf %134, %141 : vector<8x128xf32>
    %143 = arith.addf %142, %3 : vector<8x128xf32>
    %144 = tpu.concatenate %118, %143 in 0 : vector<8x128xf32>, vector<8x128xf32> -> vector<16x128xf32>
    %c0_53 = arith.constant 0 : index
    %c0_54 = arith.constant 0 : index
    %145 = vector.load %arg17[%c0_53, %c0_54] : memref<16x128xf32, #tpu.memory_space<vmem>>, vector<16x128xf32>
    tpu.vector_store %arg17[%c0_53, %c0_54], %144 {strides = array<i32>} : memref<16x128xf32, #tpu.memory_space<vmem>>, vector<16x128xf32>,
    return
  }
  func.func @transform_0(%arg0: i32) -> (i32, i32, i32) {
    %c0_i32 = arith.constant 0 : i32
    %c0_i32_0 = arith.constant 0 : i32
    %c0_i32_1 = arith.constant 0 : i32
    return %c0_i32, %c0_i32_0, %arg0 : i32, i32, i32
  }
  func.func @transform_1(%arg0: i32) -> (i32, i32, i32) {
    %c0_i32 = arith.constant 0 : i32
    %c0_i32_0 = arith.constant 0 : i32
    %c0_i32_1 = arith.constant 0 : i32
    return %c0_i32, %c0_i32_0, %arg0 : i32, i32, i32
  }
  func.func @transform_2(%arg0: i32) -> (i32, i32) {
    %c0_i32 = arith.constant 0 : i32
    %c0_i32_0 = arith.constant 0 : i32
    %c0_i32_1 = arith.constant 0 : i32
    return %c0_i32, %c0_i32_0 : i32, i32
  }
  func.func @transform_3(%arg0: i32) -> (i32, i32) {
    %c0_i32 = arith.constant 0 : i32
    %c0_i32_0 = arith.constant 0 : i32
    %c0_i32_1 = arith.constant 0 : i32
    return %c0_i32, %c0_i32_0 : i32, i32
  }
  func.func @transform_4(%arg0: i32) -> (i32, i32) {
    %c0_i32 = arith.constant 0 : i32
    %c0_i32_0 = arith.constant 0 : i32
    %c0_i32_1 = arith.constant 0 : i32
    return %c0_i32, %c0_i32_0 : i32, i32
  }
  func.func @transform_5(%arg0: i32) -> (i32, i32) {
    %c0_i32 = arith.constant 0 : i32
    %c0_i32_0 = arith.constant 0 : i32
    %c0_i32_1 = arith.constant 0 : i32
    return %c0_i32, %c0_i32_0 : i32, i32
  }
  func.func @transform_6(%arg0: i32) -> (i32, i32) {
    %c0_i32 = arith.constant 0 : i32
    %c0_i32_0 = arith.constant 0 : i32
    %c0_i32_1 = arith.constant 0 : i32
    return %c0_i32, %c0_i32_0 : i32, i32
  }
  func.func @transform_7(%arg0: i32) -> (i32, i32) {
    %c0_i32 = arith.constant 0 : i32
    %c0_i32_0 = arith.constant 0 : i32
    %c0_i32_1 = arith.constant 0 : i32
    return %c0_i32, %c0_i32_0 : i32, i32
  }
  func.func @transform_8(%arg0: i32) -> (i32, i32) {
    %c0_i32 = arith.constant 0 : i32
    %c0_i32_0 = arith.constant 0 : i32
    %c0_i32_1 = arith.constant 0 : i32
    return %c0_i32, %c0_i32_0 : i32, i32
  }
  func.func @transform_9(%arg0: i32) -> (i32, i32) {
    %c0_i32 = arith.constant 0 : i32
    %c0_i32_0 = arith.constant 0 : i32
    %c0_i32_1 = arith.constant 0 : i32
    return %c0_i32, %c0_i32_0 : i32, i32
  }
  func.func @transform_10(%arg0: i32) -> (i32, i32) {
    %c0_i32 = arith.constant 0 : i32
    %c0_i32_0 = arith.constant 0 : i32
    %c0_i32_1 = arith.constant 0 : i32
    return %c0_i32, %c0_i32_0 : i32, i32
  }
  func.func @transform_11(%arg0: i32) -> (i32, i32) {
    %c0_i32 = arith.constant 0 : i32
    %c0_i32_0 = arith.constant 0 : i32
    %c0_i32_1 = arith.constant 0 : i32
    return %c0_i32, %c0_i32_0 : i32, i32
  }
  func.func @transform_12(%arg0: i32) -> (i32, i32) {
    %c0_i32 = arith.constant 0 : i32
    %c0_i32_0 = arith.constant 0 : i32
    %c0_i32_1 = arith.constant 0 : i32
    return %c0_i32, %c0_i32_0 : i32, i32
  }
  func.func @transform_13(%arg0: i32) -> (i32, i32) {
    %c0_i32 = arith.constant 0 : i32
    %c0_i32_0 = arith.constant 0 : i32
    %c0_i32_1 = arith.constant 0 : i32
    return %c0_i32, %c0_i32_0 : i32, i32
  }
  func.func @transform_14(%arg0: i32) -> (i32, i32) {
    %c0_i32 = arith.constant 0 : i32
    %c0_i32_0 = arith.constant 0 : i32
    %c0_i32_1 = arith.constant 0 : i32
    return %c0_i32, %c0_i32_0 : i32, i32
  }
  func.func @transform_15(%arg0: i32) -> (i32, i32) {
    %c0_i32 = arith.constant 0 : i32
    %c0_i32_0 = arith.constant 0 : i32
    %c0_i32_1 = arith.constant 0 : i32
    return %c0_i32, %c0_i32_0 : i32, i32
  }
  func.func @transform_16(%arg0: i32) -> (i32, i32) {
    %c0_i32 = arith.constant 0 : i32
    %c0_i32_0 = arith.constant 0 : i32
    return %c0_i32, %arg0 : i32, i32
  }
}

</mosaic_0001>

<llo_original>
// kernel: tpu_custom_call.1
$region0: #{tpu_custom_call.1}
  #allocation0 [shape = 'u32[]', space=smem, size = 0x4, offset = 0x4, fixed_abs, tag = 'smem constant byte address 0x4 - core index']
  #allocation1 [shape = 'u32[144,128]{1,0:T(1,128)}', space=vmem, size = 0x12000, scoped, tag = 'internal scratch']
  #allocation2 [shape = 'f32[1,1]{1,0:T(1,128)S(1)}', space=vmem, size = 0x200, scoped, tag = 'scoped memory for tpu_custom_call.1']
  %s0 = inlined_call_operand.vmem [shape: f32[2,8,128], index: 0, kind: input, shape index: {}]
  %s1 = inlined_call_operand.vmem [shape: f32[2,8,128], index: 1, kind: input, shape index: {}]
  %s2 = inlined_call_operand.vmem [shape: f32[48,8], index: 2, kind: input, shape index: {}]
  %s3 = inlined_call_operand.vmem [shape: f32[16,8], index: 3, kind: input, shape index: {}]
  %s4 = inlined_call_operand.vmem [shape: f32[16,16], index: 4, kind: input, shape index: {}]
  %s5 = inlined_call_operand.vmem [shape: f32[16,16], index: 5, kind: input, shape index: {}]
  %s6 = inlined_call_operand.vmem [shape: f32[32,16], index: 6, kind: input, shape index: {}]
  %s7 = inlined_call_operand.vmem [shape: f32[8,16], index: 7, kind: input, shape index: {}]
  %s8 = inlined_call_operand.vmem [shape: f32[16,1], index: 8, kind: input, shape index: {}]
  %s9 = inlined_call_operand.vmem [shape: f32[16,1], index: 9, kind: input, shape index: {}]
  %s10 = inlined_call_operand.vmem [shape: f32[16,1], index: 10, kind: input, shape index: {}]
  %s11 = inlined_call_operand.vmem [shape: f32[16,1], index: 11, kind: input, shape index: {}]
  %s12 = inlined_call_operand.vmem [shape: f32[16,1], index: 12, kind: input, shape index: {}]
  %s13 = inlined_call_operand.vmem [shape: f32[32,1], index: 13, kind: input, shape index: {}]
  %s14 = inlined_call_operand.vmem [shape: f32[8,1], index: 14, kind: input, shape index: {}]
  %s15 = inlined_call_operand.<no memory space> [shape: f32[1,1], index: 15, kind: input, shape index: {}]
  %s16 = inlined_call_operand.hbm [shape: f32[16,128], index: 16, kind: output, shape index: {}]
  %s17 = sld [smem:[#allocation0]]
  $region74: #{tpu_custom_call.1} parent=0
    _
  %s19 = ssub.s32 1, %s17
  %s20 = scalar_select 0, %s19, %s17
  %v21 = vstv %s15
  %22 = vst [vmem:[#allocation2] sm:$0x1] %v21
  $region1: #{tpu_custom_call.1} parent=0
    #allocation3 [shape = 'u8[8192]{0}', space=vmem, size = 0x2000, scoped, tag = 'output window, operand 0, single buffered']
    #allocation4 [shape = 's32[1]{0}', space=sflag, size = 0x4, scoped, tag = 'scoped memory for tpu_custom_call.1']
    %23 = vsyncpa [#allocation4], 0
    // Predicated region
    $region2: #{tpu_custom_call.1} parent=1 // pred_check
      _
    $region3: #{tpu_custom_call.1} parent=1 // pred_check_branch
      %25 = sbr.rel (0) target = $region5
    $region4: #{tpu_custom_call.1} parent=1 // pred_region
      _
    $region5: #{tpu_custom_call.1} parent=1 // pred_fallthru
      _
    // Predicated region
    $region6: #{tpu_custom_call.1} parent=1 // pred_check
      _
    $region7: #{tpu_custom_call.1} parent=1 // pred_check_branch
      %27 = sbr.rel (0) target = $region9
    $region8: #{tpu_custom_call.1} parent=1 // pred_region
      _
    $region9: #{tpu_custom_call.1} parent=1 // pred_fallthru
      _
    // Predicated region
    $region10: #{tpu_custom_call.1} parent=1 // pred_check
      _
    $region11: #{tpu_custom_call.1} parent=1 // pred_check_branch
      %29 = sbr.rel (0) target = $region13
    $region12: #{tpu_custom_call.1} parent=1 // pred_region
      _
    $region13: #{tpu_custom_call.1} parent=1 // pred_fallthru
      _
    // Predicated region
    $region14: #{tpu_custom_call.1} parent=1 // pred_check
      _
    $region15: #{tpu_custom_call.1} parent=1 // pred_check_branch
      %31 = sbr.rel (0) target = $region17
    $region16: #{tpu_custom_call.1} parent=1 // pred_region
      _
    $region17: #{tpu_custom_call.1} parent=1 // pred_fallthru
      _
    // Predicated region
    $region18: #{tpu_custom_call.1} parent=1 // pred_check
      _
    $region19: #{tpu_custom_call.1} parent=1 // pred_check_branch
      %33 = sbr.rel (0) target = $region21
    $region20: #{tpu_custom_call.1} parent=1 // pred_region
      _
    $region21: #{tpu_custom_call.1} parent=1 // pred_fallthru
      _
    // Predicated region
    $region22: #{tpu_custom_call.1} parent=1 // pred_check
      _
    $region23: #{tpu_custom_call.1} parent=1 // pred_check_branch
      %35 = sbr.rel (0) target = $region25
    $region24: #{tpu_custom_call.1} parent=1 // pred_region
      _
    $region25: #{tpu_custom_call.1} parent=1 // pred_fallthru
      _
    // Predicated region
    $region26: #{tpu_custom_call.1} parent=1 // pred_check
      _
    $region27: #{tpu_custom_call.1} parent=1 // pred_check_branch
      %37 = sbr.rel (0) target = $region29
    $region28: #{tpu_custom_call.1} parent=1 // pred_region
      _
    $region29: #{tpu_custom_call.1} parent=1 // pred_fallthru
      _
    // Predicated region
    $region30: #{tpu_custom_call.1} parent=1 // pred_check
      _
    $region31: #{tpu_custom_call.1} parent=1 // pred_check_branch
      %39 = sbr.rel (0) target = $region33
    $region32: #{tpu_custom_call.1} parent=1 // pred_region
      _
    $region33: #{tpu_custom_call.1} parent=1 // pred_fallthru
      _
    // Predicated region
    $region34: #{tpu_custom_call.1} parent=1 // pred_check
      _
    $region35: #{tpu_custom_call.1} parent=1 // pred_check_branch
      %41 = sbr.rel (0) target = $region37
    $region36: #{tpu_custom_call.1} parent=1 // pred_region
      _
    $region37: #{tpu_custom_call.1} parent=1 // pred_fallthru
      _
    // Predicated region
    $region38: #{tpu_custom_call.1} parent=1 // pred_check
      _
    $region39: #{tpu_custom_call.1} parent=1 // pred_check_branch
      %43 = sbr.rel (0) target = $region41
    $region40: #{tpu_custom_call.1} parent=1 // pred_region
      _
    $region41: #{tpu_custom_call.1} parent=1 // pred_fallthru
      _
    // Predicated region
    $region42: #{tpu_custom_call.1} parent=1 // pred_check
      _
    $region43: #{tpu_custom_call.1} parent=1 // pred_check_branch
      %45 = sbr.rel (0) target = $region45
    $region44: #{tpu_custom_call.1} parent=1 // pred_region
      _
    $region45: #{tpu_custom_call.1} parent=1 // pred_fallthru
      _
    // Predicated region
    $region46: #{tpu_custom_call.1} parent=1 // pred_check
      _
    $region47: #{tpu_custom_call.1} parent=1 // pred_check_branch
      %47 = sbr.rel (0) target = $region49
    $region48: #{tpu_custom_call.1} parent=1 // pred_region
      _
    $region49: #{tpu_custom_call.1} parent=1 // pred_fallthru
      _
    // Predicated region
    $region50: #{tpu_custom_call.1} parent=1 // pred_check
      _
    $region51: #{tpu_custom_call.1} parent=1 // pred_check_branch
      %49 = sbr.rel (0) target = $region53
    $region52: #{tpu_custom_call.1} parent=1 // pred_region
      _
    $region53: #{tpu_custom_call.1} parent=1 // pred_fallthru
      _
    // Predicated region
    $region54: #{tpu_custom_call.1} parent=1 // pred_check
      _
    $region55: #{tpu_custom_call.1} parent=1 // pred_check_branch
      %51 = sbr.rel (0) target = $region57
    $region56: #{tpu_custom_call.1} parent=1 // pred_region
      _
    $region57: #{tpu_custom_call.1} parent=1 // pred_fallthru
      _
    // Predicated region
    $region58: #{tpu_custom_call.1} parent=1 // pred_check
      _
    $region59: #{tpu_custom_call.1} parent=1 // pred_check_branch
      %53 = sbr.rel (0) target = $region61
    $region60: #{tpu_custom_call.1} parent=1 // pred_region
      _
    $region61: #{tpu_custom_call.1} parent=1 // pred_fallthru
      _
    // Predicated region
    $region62: #{tpu_custom_call.1} parent=1 // pred_check
      _
    $region63: #{tpu_custom_call.1} parent=1 // pred_check_branch
      %55 = sbr.rel (0) target = $region65
    $region64: #{tpu_custom_call.1} parent=1 // pred_region
      _
    $region65: #{tpu_custom_call.1} parent=1 // pred_fallthru
      _
    %v56 = vld [vmem:[%s0] sm:$0xff]
    %s57 = scalar_lea.vmem %s0, 8
    %v58 = vld [vmem:[%s57] sm:$0xff]
    %v59 = vld [vmem:[%s1] sm:$0xff]
    %s60 = scalar_lea.vmem %s1, 8
    %v61 = vld [vmem:[%s60] sm:$0xff]
    %v62 = vld [vmem:[%s2] sm:$0xff]
    %v63 = vld [vmem:[%s2 + $0x8] sm:$0xff]
    %v64 = vld [vmem:[%s2 + $0x10] sm:$0xff]
    %v65 = vld [vmem:[%s2 + $0x18] sm:$0xff]
    %v66 = vld [vmem:[%s2 + $0x20] sm:$0xff]
    %v67 = vld [vmem:[%s2 + $0x28] sm:$0xff]
    %vm68 = vcmask 64512
    %v70 = vsel %vm68, %v62, 0
    %v73 = vsel %vm68, %v63, 0
    %v76 = vsel %vm68, %v64, 0
    %v79 = vsel %vm68, %v65, 0
    %v82 = vsel %vm68, %v66, 0
    %v85 = vsel %vm68, %v67, 0
    %87 = vmatprep.subr.mxu0 %v58
    %88 = vmatpush1.msra.mxu0 %v56
    %89 = vmatprep.subr.mxu0 0.0
    %90 = vmatpush1.msra.mxu0 0.0
    %91 = vmatprep.subr.mxu0 0.0
    %92 = vmatpush1.msra.mxu0 0.0
    %93 = vmatprep.subr.mxu0 0.0
    %94 = vmatpush1.msra.mxu0 0.0
    %95 = vmatprep.subr.mxu0 0.0
    %96 = vmatpush1.msra.mxu0 0.0
    %97 = vmatprep.subr.mxu0 0.0
    %98 = vmatpush1.msra.mxu0 0.0
    %99 = vmatprep.subr.mxu0 0.0
    %100 = vmatpush1.msra.mxu0 0.0
    %101 = vmatprep.subr.mxu0 0.0
    %102 = vmatpush1.msra.mxu0 0.0
    %103 = vmatprep.subr.mxu0 0.0
    %104 = vmatpush1.msra.mxu0 0.0
    %105 = vmatprep.subr.mxu0 0.0
    %106 = vmatpush1.msra.mxu0 0.0
    %107 = vmatprep.subr.mxu0 0.0
    %108 = vmatpush1.msra.mxu0 0.0
    %109 = vmatprep.subr.mxu0 0.0
    %110 = vmatpush1.msra.mxu0 0.0
    %111 = vmatprep.subr.mxu0 0.0
    %112 = vmatpush1.msra.mxu0 0.0
    %113 = vmatprep.subr.mxu0 0.0
    %114 = vmatpush1.msra.mxu0 0.0
    %115 = vmatprep.subr.mxu0 0.0
    %116 = vmatpush1.msra.mxu0 0.0
    %117 = vmatprep.subr.mxu0 0.0
    %118 = vmatpush1.msra.mxu0 0.0
    %119 = vmatprep.subr.mxu0 0.0
    %120 = vmatpush1.msra.mxu0 0.0
    %121 = vmatprep.subr.mxu0 0.0
    %122 = vmatpush1.msra.mxu0 0.0
    %123 = vmatprep.subr.mxu0 0.0
    %124 = vmatpush1.msra.mxu0 0.0
    %125 = vmatprep.subr.mxu0 0.0
    %126 = vmatpush1.msra.mxu0 0.0
    %127 = vmatprep.subr.mxu0 0.0
    %128 = vmatpush1.msra.mxu0 0.0
    %129 = vmatprep.subr.mxu0 0.0
    %130 = vmatpush1.msra.mxu0 0.0
    %131 = vmatprep.subr.mxu0 0.0
    %132 = vmatpush1.msra.mxu0 0.0
    %133 = vmatprep.subr.mxu0 0.0
    %134 = vmatpush1.msra.mxu0 0.0
    %135 = vmatprep.subr.mxu0 0.0
    %136 = vmatpush1.msra.mxu0 0.0
    %137 = vmatprep.subr.mxu0 0.0
    %138 = vmatpush1.msra.mxu0 0.0
    %139 = vmatprep.subr.mxu0 0.0
    %140 = vmatpush1.msra.mxu0 0.0
    %141 = vmatprep.subr.mxu0 0.0
    %142 = vmatpush1.msra.mxu0 0.0
    %143 = vmatprep.subr.mxu0 0.0
    %144 = vmatpush1.msra.mxu0 0.0
    %145 = vmatprep.subr.mxu0 0.0
    %146 = vmatpush1.msra.mxu0 0.0
    %147 = vmatprep.subr.mxu0 0.0
    %148 = vmatpush1.msra.mxu0 0.0
    %149 = vmatprep.subr.mxu0 0.0
    %150 = vmatpush1.msra.mxu0 0.0
    %151 = vmatprep.mubr.f32.mxu0 0.0
    %152 = vmatmul.mubr.f32.gmra.mrb[0].mxu0 %v70
    %v153 = vpop.f32.mrb[0].mxu0
    %v154 = vadd.f32 0.0, %v153
    %v155 = vpop.f32.mrb[0].mxu0
    %v156 = vadd.f32 0.0, %v155
    %157 = vmatprep.mubr.f32.mxu0 0.0
    %158 = vmatmul.mubr.f32.gmra.mrb[0].mxu0 %v73
    %v159 = vpop.f32.mrb[0].mxu0
    %v160 = vadd.f32 0.0, %v159
    %v161 = vpop.f32.mrb[0].mxu0
    %v162 = vadd.f32 0.0, %v161
    %163 = vmatprep.mubr.f32.mxu0 0.0
    %164 = vmatmul.mubr.f32.gmra.mrb[0].mxu0 %v76
    %v165 = vpop.f32.mrb[0].mxu0
    %v166 = vadd.f32 0.0, %v165
    %v167 = vpop.f32.mrb[0].mxu0
    %v168 = vadd.f32 0.0, %v167
    %169 = vmatprep.mubr.f32.mxu0 0.0
    %170 = vmatmul.mubr.f32.gmra.mrb[0].mxu0 %v79
    %v171 = vpop.f32.mrb[0].mxu0
    %v172 = vadd.f32 0.0, %v171
    %v173 = vpop.f32.mrb[0].mxu0
    %v174 = vadd.f32 0.0, %v173
    %175 = vmatprep.mubr.f32.mxu0 0.0
    %176 = vmatmul.mubr.f32.gmra.mrb[0].mxu0 %v82
    %v177 = vpop.f32.mrb[0].mxu0
    %v178 = vadd.f32 0.0, %v177
    %v179 = vpop.f32.mrb[0].mxu0
    %v180 = vadd.f32 0.0, %v179
    %181 = vmatprep.mubr.f32.mxu0 0.0
    %182 = vmatmul.mubr.f32.gmra.mrb[0].mxu0 %v85
    %v183 = vpop.f32.mrb[0].mxu0
    %v184 = vadd.f32 0.0, %v183
    %v185 = vpop.f32.mrb[0].mxu0
    %v186 = vadd.f32 0.0, %v185
    %187 = vdwg.mxu0
    %v188 = vld [vmem:[%s9] sm:$0xff]
    %v189 = vld [vmem:[%s9 + $0x8] sm:$0xff]
    %191 = vset.pattern.permute.xlu0 0
    %192 = vperm.xlu0 %191, %v188
    %v193 = vpop.permute.xlu0 %192
    %196 = vset.pattern.permute.xlu0 0
    %197 = vperm.xlu0 %196, %v189
    %v198 = vpop.permute.xlu0 %197
    %v200 = vadd.f32 %v154, %v193
    %v201 = vadd.f32 %v156, %v193
    %v202 = vadd.f32 %v160, %v198
    %v203 = vadd.f32 %v162, %v198
    %v204 = vld [vmem:[%s3] sm:$0xff]
    %v205 = vld [vmem:[%s3 + $0x8] sm:$0xff]
    %v207 = vsel %vm68, %v204, 0
    %v210 = vsel %vm68, %v205, 0
    %212 = vmatprep.subr.mxu0 %v61
    %213 = vmatpush1.msra.mxu0 %v59
    %214 = vmatprep.subr.mxu0 0.0
    %215 = vmatpush1.msra.mxu0 0.0
    %216 = vmatprep.subr.mxu0 0.0
    %217 = vmatpush1.msra.mxu0 0.0
    %218 = vmatprep.subr.mxu0 0.0
    %219 = vmatpush1.msra.mxu0 0.0
    %220 = vmatprep.subr.mxu0 0.0
    %221 = vmatpush1.msra.mxu0 0.0
    %222 = vmatprep.subr.mxu0 0.0
    %223 = vmatpush1.msra.mxu0 0.0
    %224 = vmatprep.subr.mxu0 0.0
    %225 = vmatpush1.msra.mxu0 0.0
    %226 = vmatprep.subr.mxu0 0.0
    %227 = vmatpush1.msra.mxu0 0.0
    %228 = vmatprep.subr.mxu0 0.0
    %229 = vmatpush1.msra.mxu0 0.0
    %230 = vmatprep.subr.mxu0 0.0
    %231 = vmatpush1.msra.mxu0 0.0
    %232 = vmatprep.subr.mxu0 0.0
    %233 = vmatpush1.msra.mxu0 0.0
    %234 = vmatprep.subr.mxu0 0.0
    %235 = vmatpush1.msra.mxu0 0.0
    %236 = vmatprep.subr.mxu0 0.0
    %237 = vmatpush1.msra.mxu0 0.0
    %238 = vmatprep.subr.mxu0 0.0
    %239 = vmatpush1.msra.mxu0 0.0
    %240 = vmatprep.subr.mxu0 0.0
    %241 = vmatpush1.msra.mxu0 0.0
    %242 = vmatprep.subr.mxu0 0.0
    %243 = vmatpush1.msra.mxu0 0.0
    %244 = vmatprep.subr.mxu0 0.0
    %245 = vmatpush1.msra.mxu0 0.0
    %246 = vmatprep.subr.mxu0 0.0
    %247 = vmatpush1.msra.mxu0 0.0
    %248 = vmatprep.subr.mxu0 0.0
    %249 = vmatpush1.msra.mxu0 0.0
    %250 = vmatprep.subr.mxu0 0.0
    %251 = vmatpush1.msra.mxu0 0.0
    %252 = vmatprep.subr.mxu0 0.0
    %253 = vmatpush1.msra.mxu0 0.0
    %254 = vmatprep.subr.mxu0 0.0
    %255 = vmatpush1.msra.mxu0 0.0
    %256 = vmatprep.subr.mxu0 0.0
    %257 = vmatpush1.msra.mxu0 0.0
    %258 = vmatprep.subr.mxu0 0.0
    %259 = vmatpush1.msra.mxu0 0.0
    %260 = vmatprep.subr.mxu0 0.0
    %261 = vmatpush1.msra.mxu0 0.0
    %262 = vmatprep.subr.mxu0 0.0
    %263 = vmatpush1.msra.mxu0 0.0
    %264 = vmatprep.subr.mxu0 0.0
    %265 = vmatpush1.msra.mxu0 0.0
    %266 = vmatprep.subr.mxu0 0.0
    %267 = vmatpush1.msra.mxu0 0.0
    %268 = vmatprep.subr.mxu0 0.0
    %269 = vmatpush1.msra.mxu0 0.0
    %270 = vmatprep.subr.mxu0 0.0
    %271 = vmatpush1.msra.mxu0 0.0
    %272 = vmatprep.subr.mxu0 0.0
    %273 = vmatpush1.msra.mxu0 0.0
    %274 = vmatprep.subr.mxu0 0.0
    %275 = vmatpush1.msra.mxu0 0.0
    %276 = vmatprep.mubr.f32.mxu0 0.0
    %277 = vmatmul.mubr.f32.gmra.mrb[0].mxu0 %v207
    %v278 = vpop.f32.mrb[0].mxu0
    %v279 = vadd.f32 0.0, %v278
    %v280 = vpop.f32.mrb[0].mxu0
    %v281 = vadd.f32 0.0, %v280
    %282 = vmatprep.mubr.f32.mxu0 0.0
    %283 = vmatmul.mubr.f32.gmra.mrb[0].mxu0 %v210
    %v284 = vpop.f32.mrb[0].mxu0
    %v285 = vadd.f32 0.0, %v284
    %v286 = vpop.f32.mrb[0].mxu0
    %v287 = vadd.f32 0.0, %v286
    %288 = vdwg.mxu0
    %v289 = vld [vmem:[%s10] sm:$0xff]
    %v290 = vld [vmem:[%s10 + $0x8] sm:$0xff]
    %292 = vset.pattern.permute.xlu0 0
    %293 = vperm.xlu0 %292, %v289
    %v294 = vpop.permute.xlu0 %293
    %297 = vset.pattern.permute.xlu0 0
    %298 = vperm.xlu0 %297, %v290
    %v299 = vpop.permute.xlu0 %298
    %v301 = vadd.f32 %v279, %v294
    %v302 = vadd.f32 %v281, %v294
    %v303 = vadd.f32 %v285, %v299
    %v304 = vadd.f32 %v287, %v299
    %v305 = vadd.f32 %v200, %v166
    %v306 = vadd.f32 %v202, %v172
    %v307 = vmax.f32 %v305, 0.0
    %v308 = vmax.f32 %v306, 0.0
    %v309 = vsub.f32 %v301, %v279
    %v310 = vsub.f32 %v303, %v285
    %v311 = vadd.f32 %v307, %v309
    %v312 = vadd.f32 %v308, %v310
    %v313 = vadd.f32 %v200, %v168
    %v314 = vadd.f32 %v202, %v174
    %v315 = vmax.f32 %v313, 0.0
    %v316 = vmax.f32 %v314, 0.0
    %v317 = vsub.f32 %v301, %v281
    %v318 = vsub.f32 %v303, %v287
    %v319 = vadd.f32 %v315, %v317
    %v320 = vadd.f32 %v316, %v318
    %v321 = vadd.f32 %v201, %v166
    %v322 = vadd.f32 %v203, %v172
    %v323 = vmax.f32 %v321, 0.0
    %v324 = vmax.f32 %v322, 0.0
    %v325 = vsub.f32 %v302, %v279
    %v326 = vsub.f32 %v304, %v285
    %v327 = vadd.f32 %v323, %v325
    %v328 = vadd.f32 %v324, %v326
    %v329 = vadd.f32 %v201, %v168
    %v330 = vadd.f32 %v203, %v174
    %v331 = vmax.f32 %v329, 0.0
    %v332 = vmax.f32 %v330, 0.0
    %v333 = vsub.f32 %v302, %v281
    %v334 = vsub.f32 %v304, %v287
    %v335 = vadd.f32 %v331, %v333
    %v336 = vadd.f32 %v332, %v334
    %v337 = vld [vmem:[%s4] sm:$0xff]
    %v338 = vld [vmem:[%s4 + $0x8] sm:$0xff]
    %v339 = vld [vmem:[%s11] sm:$0xff]
    %v340 = vld [vmem:[%s11 + $0x8] sm:$0xff]
    %342 = vset.pattern.permute.xlu0 0
    %343 = vperm.xlu0 %342, %v339
    %v344 = vpop.permute.xlu0 %343
    %347 = vset.pattern.permute.xlu0 0
    %348 = vperm.xlu0 %347, %v340
    %v349 = vpop.permute.xlu0 %348
    %vm351 = vcmask 130048
    %v353 = vsel %vm351, %v337, 0
    %v356 = vsel %vm351, %v338, 0
    %358 = vmatprep.subr.mxu0 %v319
    %359 = vmatpush1.msra.mxu0 %v311
    %360 = vmatprep.subr.mxu0 %v320
    %361 = vmatpush1.msra.mxu0 %v312
    %362 = vmatprep.subr.mxu0 0.0
    %363 = vmatpush1.msra.mxu0 0.0
    %364 = vmatprep.subr.mxu0 0.0
    %365 = vmatpush1.msra.mxu0 0.0
    %366 = vmatprep.subr.mxu0 0.0
    %367 = vmatpush1.msra.mxu0 0.0
    %368 = vmatprep.subr.mxu0 0.0
    %369 = vmatpush1.msra.mxu0 0.0
    %370 = vmatprep.subr.mxu0 0.0
    %371 = vmatpush1.msra.mxu0 0.0
    %372 = vmatprep.subr.mxu0 0.0
    %373 = vmatpush1.msra.mxu0 0.0
    %374 = vmatprep.subr.mxu0 0.0
    %375 = vmatpush1.msra.mxu0 0.0
    %376 = vmatprep.subr.mxu0 0.0
    %377 = vmatpush1.msra.mxu0 0.0
    %378 = vmatprep.subr.mxu0 0.0
    %379 = vmatpush1.msra.mxu0 0.0
    %380 = vmatprep.subr.mxu0 0.0
    %381 = vmatpush1.msra.mxu0 0.0
    %382 = vmatprep.subr.mxu0 0.0
    %383 = vmatpush1.msra.mxu0 0.0
    %384 = vmatprep.subr.mxu0 0.0
    %385 = vmatpush1.msra.mxu0 0.0
    %386 = vmatprep.subr.mxu0 0.0
    %387 = vmatpush1.msra.mxu0 0.0
    %388 = vmatprep.subr.mxu0 0.0
    %389 = vmatpush1.msra.mxu0 0.0
    %390 = vmatprep.subr.mxu0 0.0
    %391 = vmatpush1.msra.mxu0 0.0
    %392 = vmatprep.subr.mxu0 0.0
    %393 = vmatpush1.msra.mxu0 0.0
    %394 = vmatprep.subr.mxu0 0.0
    %395 = vmatpush1.msra.mxu0 0.0
    %396 = vmatprep.subr.mxu0 0.0
    %397 = vmatpush1.msra.mxu0 0.0
    %398 = vmatprep.subr.mxu0 0.0
    %399 = vmatpush1.msra.mxu0 0.0
    %400 = vmatprep.subr.mxu0 0.0
    %401 = vmatpush1.msra.mxu0 0.0
    %402 = vmatprep.subr.mxu0 0.0
    %403 = vmatpush1.msra.mxu0 0.0
    %404 = vmatprep.subr.mxu0 0.0
    %405 = vmatpush1.msra.mxu0 0.0
    %406 = vmatprep.subr.mxu0 0.0
    %407 = vmatpush1.msra.mxu0 0.0
    %408 = vmatprep.subr.mxu0 0.0
    %409 = vmatpush1.msra.mxu0 0.0
    %410 = vmatprep.subr.mxu0 0.0
    %411 = vmatpush1.msra.mxu0 0.0
    %412 = vmatprep.subr.mxu0 0.0
    %413 = vmatpush1.msra.mxu0 0.0
    %414 = vmatprep.subr.mxu0 0.0
    %415 = vmatpush1.msra.mxu0 0.0
    %416 = vmatprep.subr.mxu0 0.0
    %417 = vmatpush1.msra.mxu0 0.0
    %418 = vmatprep.subr.mxu0 0.0
    %419 = vmatpush1.msra.mxu0 0.0
    %420 = vmatprep.subr.mxu0 0.0
    %421 = vmatpush1.msra.mxu0 0.0
    %422 = vmatprep.mubr.f32.mxu0 0.0
    %423 = vmatmul.mubr.f32.gmra.mrb[0].mxu0 %v353
    %v424 = vpop.f32.mrb[0].mxu0
    %v425 = vadd.f32 %v344, %v424
    %v426 = vpop.f32.mrb[0].mxu0
    %v427 = vadd.f32 %v344, %v426
    %428 = vmatprep.mubr.f32.mxu0 0.0
    %429 = vmatmul.mubr.f32.gmra.mrb[0].mxu0 %v356
    %v430 = vpop.f32.mrb[0].mxu0
    %v431 = vadd.f32 %v349, %v430
    %v432 = vpop.f32.mrb[0].mxu0
    %v433 = vadd.f32 %v349, %v432
    %434 = vdwg.mxu0
    %435 = vmatprep.subr.mxu0 %v335
    %436 = vmatpush1.msra.mxu0 %v327
    %437 = vmatprep.subr.mxu0 %v336
    %438 = vmatpush1.msra.mxu0 %v328
    %439 = vmatprep.subr.mxu0 0.0
    %440 = vmatpush1.msra.mxu0 0.0
    %441 = vmatprep.subr.mxu0 0.0
    %442 = vmatpush1.msra.mxu0 0.0
    %443 = vmatprep.subr.mxu0 0.0
    %444 = vmatpush1.msra.mxu0 0.0
    %445 = vmatprep.subr.mxu0 0.0
    %446 = vmatpush1.msra.mxu0 0.0
    %447 = vmatprep.subr.mxu0 0.0
    %448 = vmatpush1.msra.mxu0 0.0
    %449 = vmatprep.subr.mxu0 0.0
    %450 = vmatpush1.msra.mxu0 0.0
    %451 = vmatprep.subr.mxu0 0.0
    %452 = vmatpush1.msra.mxu0 0.0
    %453 = vmatprep.subr.mxu0 0.0
    %454 = vmatpush1.msra.mxu0 0.0
    %455 = vmatprep.subr.mxu0 0.0
    %456 = vmatpush1.msra.mxu0 0.0
    %457 = vmatprep.subr.mxu0 0.0
    %458 = vmatpush1.msra.mxu0 0.0
    %459 = vmatprep.subr.mxu0 0.0
    %460 = vmatpush1.msra.mxu0 0.0
    %461 = vmatprep.subr.mxu0 0.0
    %462 = vmatpush1.msra.mxu0 0.0
    %463 = vmatprep.subr.mxu0 0.0
    %464 = vmatpush1.msra.mxu0 0.0
    %465 = vmatprep.subr.mxu0 0.0
    %466 = vmatpush1.msra.mxu0 0.0
    %467 = vmatprep.subr.mxu0 0.0
    %468 = vmatpush1.msra.mxu0 0.0
    %469 = vmatprep.subr.mxu0 0.0
    %470 = vmatpush1.msra.mxu0 0.0
    %471 = vmatprep.subr.mxu0 0.0
    %472 = vmatpush1.msra.mxu0 0.0
    %473 = vmatprep.subr.mxu0 0.0
    %474 = vmatpush1.msra.mxu0 0.0
    %475 = vmatprep.subr.mxu0 0.0
    %476 = vmatpush1.msra.mxu0 0.0
    %477 = vmatprep.subr.mxu0 0.0
    %478 = vmatpush1.msra.mxu0 0.0
    %479 = vmatprep.subr.mxu0 0.0
    %480 = vmatpush1.msra.mxu0 0.0
    %481 = vmatprep.subr.mxu0 0.0
    %482 = vmatpush1.msra.mxu0 0.0
    %483 = vmatprep.subr.mxu0 0.0
    %484 = vmatpush1.msra.mxu0 0.0
    %485 = vmatprep.subr.mxu0 0.0
    %486 = vmatpush1.msra.mxu0 0.0
    %487 = vmatprep.subr.mxu0 0.0
    %488 = vmatpush1.msra.mxu0 0.0
    %489 = vmatprep.subr.mxu0 0.0
    %490 = vmatpush1.msra.mxu0 0.0
    %491 = vmatprep.subr.mxu0 0.0
    %492 = vmatpush1.msra.mxu0 0.0
    %493 = vmatprep.subr.mxu0 0.0
    %494 = vmatpush1.msra.mxu0 0.0
    %495 = vmatprep.subr.mxu0 0.0
    %496 = vmatpush1.msra.mxu0 0.0
    %497 = vmatprep.subr.mxu0 0.0
    %498 = vmatpush1.msra.mxu0 0.0
    %499 = vmatprep.mubr.f32.mxu0 0.0
    %500 = vmatmul.mubr.f32.gmra.mrb[0].mxu0 %v353
    %v501 = vpop.f32.mrb[0].mxu0
    %v502 = vadd.f32 %v344, %v501
    %v503 = vpop.f32.mrb[0].mxu0
    %v504 = vadd.f32 %v344, %v503
    %505 = vmatprep.mubr.f32.mxu0 0.0
    %506 = vmatmul.mubr.f32.gmra.mrb[0].mxu0 %v356
    %v507 = vpop.f32.mrb[0].mxu0
    %v508 = vadd.f32 %v349, %v507
    %v509 = vpop.f32.mrb[0].mxu0
    %v510 = vadd.f32 %v349, %v509
    %511 = vdwg.mxu0
    %v512 = vmax.f32 %v425, 0.0
    %v513 = vmax.f32 %v427, 0.0
    %v514 = vmax.f32 %v502, 0.0
    %v515 = vmax.f32 %v504, 0.0
    %v516 = vmax.f32 %v431, 0.0
    %v517 = vmax.f32 %v433, 0.0
    %v518 = vmax.f32 %v508, 0.0
    %v519 = vmax.f32 %v510, 0.0
    %v520 = vld [vmem:[%s5] sm:$0xff]
    %v521 = vld [vmem:[%s5 + $0x8] sm:$0xff]
    %v522 = vld [vmem:[%s12] sm:$0xff]
    %v523 = vld [vmem:[%s12 + $0x8] sm:$0xff]
    %525 = vset.pattern.permute.xlu0 0
    %526 = vperm.xlu0 %525, %v522
    %v527 = vpop.permute.xlu0 %526
    %530 = vset.pattern.permute.xlu0 0
    %531 = vperm.xlu0 %530, %v523
    %v532 = vpop.permute.xlu0 %531
    %v535 = vsel %vm351, %v520, 0
    %v538 = vsel %vm351, %v521, 0
    %540 = vmatprep.subr.mxu0 %v513
    %541 = vmatpush1.msra.mxu0 %v512
    %542 = vmatprep.subr.mxu0 %v517
    %543 = vmatpush1.msra.mxu0 %v516
    %544 = vmatprep.subr.mxu0 0.0
    %545 = vmatpush1.msra.mxu0 0.0
    %546 = vmatprep.subr.mxu0 0.0
    %547 = vmatpush1.msra.mxu0 0.0
    %548 = vmatprep.subr.mxu0 0.0
    %549 = vmatpush1.msra.mxu0 0.0
    %550 = vmatprep.subr.mxu0 0.0
    %551 = vmatpush1.msra.mxu0 0.0
    %552 = vmatprep.subr.mxu0 0.0
    %553 = vmatpush1.msra.mxu0 0.0
    %554 = vmatprep.subr.mxu0 0.0
    %555 = vmatpush1.msra.mxu0 0.0
    %556 = vmatprep.subr.mxu0 0.0
    %557 = vmatpush1.msra.mxu0 0.0
    %558 = vmatprep.subr.mxu0 0.0
    %559 = vmatpush1.msra.mxu0 0.0
    %560 = vmatprep.subr.mxu0 0.0
    %561 = vmatpush1.msra.mxu0 0.0
    %562 = vmatprep.subr.mxu0 0.0
    %563 = vmatpush1.msra.mxu0 0.0
    %564 = vmatprep.subr.mxu0 0.0
    %565 = vmatpush1.msra.mxu0 0.0
    %566 = vmatprep.subr.mxu0 0.0
    %567 = vmatpush1.msra.mxu0 0.0
    %568 = vmatprep.subr.mxu0 0.0
    %569 = vmatpush1.msra.mxu0 0.0
    %570 = vmatprep.subr.mxu0 0.0
    %571 = vmatpush1.msra.mxu0 0.0
    %572 = vmatprep.subr.mxu0 0.0
    %573 = vmatpush1.msra.mxu0 0.0
    %574 = vmatprep.subr.mxu0 0.0
    %575 = vmatpush1.msra.mxu0 0.0
    %576 = vmatprep.subr.mxu0 0.0
    %577 = vmatpush1.msra.mxu0 0.0
    %578 = vmatprep.subr.mxu0 0.0
    %579 = vmatpush1.msra.mxu0 0.0
    %580 = vmatprep.subr.mxu0 0.0
    %581 = vmatpush1.msra.mxu0 0.0
    %582 = vmatprep.subr.mxu0 0.0
    %583 = vmatpush1.msra.mxu0 0.0
    %584 = vmatprep.subr.mxu0 0.0
    %585 = vmatpush1.msra.mxu0 0.0
    %586 = vmatprep.subr.mxu0 0.0
    %587 = vmatpush1.msra.mxu0 0.0
    %588 = vmatprep.subr.mxu0 0.0
    %589 = vmatpush1.msra.mxu0 0.0
    %590 = vmatprep.subr.mxu0 0.0
    %591 = vmatpush1.msra.mxu0 0.0
    %592 = vmatprep.subr.mxu0 0.0
    %593 = vmatpush1.msra.mxu0 0.0
    %594 = vmatprep.subr.mxu0 0.0
    %595 = vmatpush1.msra.mxu0 0.0
    %596 = vmatprep.subr.mxu0 0.0
    %597 = vmatpush1.msra.mxu0 0.0
    %598 = vmatprep.subr.mxu0 0.0
    %599 = vmatpush1.msra.mxu0 0.0
    %600 = vmatprep.subr.mxu0 0.0
    %601 = vmatpush1.msra.mxu0 0.0
    %602 = vmatprep.subr.mxu0 0.0
    %603 = vmatpush1.msra.mxu0 0.0
    %604 = vmatprep.mubr.f32.mxu0 0.0
    %605 = vmatmul.mubr.f32.gmra.mrb[0].mxu0 %v535
    %v606 = vpop.f32.mrb[0].mxu0
    %v607 = vadd.f32 %v527, %v606
    %v608 = vpop.f32.mrb[0].mxu0
    %v609 = vadd.f32 %v527, %v608
    %610 = vmatprep.mubr.f32.mxu0 0.0
    %611 = vmatmul.mubr.f32.gmra.mrb[0].mxu0 %v538
    %v612 = vpop.f32.mrb[0].mxu0
    %v613 = vadd.f32 %v532, %v612
    %v614 = vpop.f32.mrb[0].mxu0
    %v615 = vadd.f32 %v532, %v614
    %616 = vdwg.mxu0
    %617 = vmatprep.subr.mxu0 %v515
    %618 = vmatpush1.msra.mxu0 %v514
    %619 = vmatprep.subr.mxu0 %v519
    %620 = vmatpush1.msra.mxu0 %v518
    %621 = vmatprep.subr.mxu0 0.0
    %622 = vmatpush1.msra.mxu0 0.0
    %623 = vmatprep.subr.mxu0 0.0
    %624 = vmatpush1.msra.mxu0 0.0
    %625 = vmatprep.subr.mxu0 0.0
    %626 = vmatpush1.msra.mxu0 0.0
    %627 = vmatprep.subr.mxu0 0.0
    %628 = vmatpush1.msra.mxu0 0.0
    %629 = vmatprep.subr.mxu0 0.0
    %630 = vmatpush1.msra.mxu0 0.0
    %631 = vmatprep.subr.mxu0 0.0
    %632 = vmatpush1.msra.mxu0 0.0
    %633 = vmatprep.subr.mxu0 0.0
    %634 = vmatpush1.msra.mxu0 0.0
    %635 = vmatprep.subr.mxu0 0.0
    %636 = vmatpush1.msra.mxu0 0.0
    %637 = vmatprep.subr.mxu0 0.0
    %638 = vmatpush1.msra.mxu0 0.0
    %639 = vmatprep.subr.mxu0 0.0
    %640 = vmatpush1.msra.mxu0 0.0
    %641 = vmatprep.subr.mxu0 0.0
    %642 = vmatpush1.msra.mxu0 0.0
    %643 = vmatprep.subr.mxu0 0.0
    %644 = vmatpush1.msra.mxu0 0.0
    %645 = vmatprep.subr.mxu0 0.0
    %646 = vmatpush1.msra.mxu0 0.0
    %647 = vmatprep.subr.mxu0 0.0
    %648 = vmatpush1.msra.mxu0 0.0
    %649 = vmatprep.subr.mxu0 0.0
    %650 = vmatpush1.msra.mxu0 0.0
    %651 = vmatprep.subr.mxu0 0.0
    %652 = vmatpush1.msra.mxu0 0.0
    %653 = vmatprep.subr.mxu0 0.0
    %654 = vmatpush1.msra.mxu0 0.0
    %655 = vmatprep.subr.mxu0 0.0
    %656 = vmatpush1.msra.mxu0 0.0
    %657 = vmatprep.subr.mxu0 0.0
    %658 = vmatpush1.msra.mxu0 0.0
    %659 = vmatprep.subr.mxu0 0.0
    %660 = vmatpush1.msra.mxu0 0.0
    %661 = vmatprep.subr.mxu0 0.0
    %662 = vmatpush1.msra.mxu0 0.0
    %663 = vmatprep.subr.mxu0 0.0
    %664 = vmatpush1.msra.mxu0 0.0
    %665 = vmatprep.subr.mxu0 0.0
    %666 = vmatpush1.msra.mxu0 0.0
    %667 = vmatprep.subr.mxu0 0.0
    %668 = vmatpush1.msra.mxu0 0.0
    %669 = vmatprep.subr.mxu0 0.0
    %670 = vmatpush1.msra.mxu0 0.0
    %671 = vmatprep.subr.mxu0 0.0
    %672 = vmatpush1.msra.mxu0 0.0
    %673 = vmatprep.subr.mxu0 0.0
    %674 = vmatpush1.msra.mxu0 0.0
    %675 = vmatprep.subr.mxu0 0.0
    %676 = vmatpush1.msra.mxu0 0.0
    %677 = vmatprep.subr.mxu0 0.0
    %678 = vmatpush1.msra.mxu0 0.0
    %679 = vmatprep.subr.mxu0 0.0
    %680 = vmatpush1.msra.mxu0 0.0
    %681 = vmatprep.mubr.f32.mxu0 0.0
    %682 = vmatmul.mubr.f32.gmra.mrb[0].mxu0 %v535
    %v683 = vpop.f32.mrb[0].mxu0
    %v684 = vadd.f32 %v527, %v683
    %v685 = vpop.f32.mrb[0].mxu0
    %v686 = vadd.f32 %v527, %v685
    %687 = vmatprep.mubr.f32.mxu0 0.0
    %688 = vmatmul.mubr.f32.gmra.mrb[0].mxu0 %v538
    %v689 = vpop.f32.mrb[0].mxu0
    %v690 = vadd.f32 %v532, %v689
    %v691 = vpop.f32.mrb[0].mxu0
    %v692 = vadd.f32 %v532, %v691
    %693 = vdwg.mxu0
    %v694 = vmax.f32 %v607, 0.0
    %v695 = vmax.f32 %v609, 0.0
    %v696 = vmax.f32 %v684, 0.0
    %v697 = vmax.f32 %v686, 0.0
    %v698 = vmax.f32 %v613, 0.0
    %v699 = vmax.f32 %v615, 0.0
    %v700 = vmax.f32 %v690, 0.0
    %v701 = vmax.f32 %v692, 0.0
    %v702 = vadd.f32 %v311, %v694
    %v703 = vadd.f32 %v319, %v695
    %v704 = vadd.f32 %v327, %v696
    %v705 = vadd.f32 %v335, %v697
    %v706 = vadd.f32 %v312, %v698
    %v707 = vadd.f32 %v320, %v699
    %v708 = vadd.f32 %v328, %v700
    %v709 = vadd.f32 %v336, %v701
    %v710 = vld [vmem:[%s6] sm:$0xff]
    %v711 = vld [vmem:[%s6 + $0x8] sm:$0xff]
    %v712 = vld [vmem:[%s6 + $0x10] sm:$0xff]
    %v713 = vld [vmem:[%s6 + $0x18] sm:$0xff]
    %v714 = vld [vmem:[%s13] sm:$0xff]
    %v715 = vld [vmem:[%s13 + $0x8] sm:$0xff]
    %v716 = vld [vmem:[%s13 + $0x10] sm:$0xff]
    %v717 = vld [vmem:[%s13 + $0x18] sm:$0xff]
    %719 = vset.pattern.permute.xlu0 0
    %720 = vperm.xlu0 %719, %v714
    %v721 = vpop.permute.xlu0 %720
    %724 = vset.pattern.permute.xlu0 0
    %725 = vperm.xlu0 %724, %v715
    %v726 = vpop.permute.xlu0 %725
    %729 = vset.pattern.permute.xlu0 0
    %730 = vperm.xlu0 %729, %v716
    %v731 = vpop.permute.xlu0 %730
    %734 = vset.pattern.permute.xlu0 0
    %735 = vperm.xlu0 %734, %v717
    %v736 = vpop.permute.xlu0 %735
    %v739 = vsel %vm351, %v710, 0
    %v742 = vsel %vm351, %v711, 0
    %v745 = vsel %vm351, %v712, 0
    %v748 = vsel %vm351, %v713, 0
    %750 = vmatprep.subr.mxu0 %v703
    %751 = vmatpush1.msra.mxu0 %v702
    %752 = vmatprep.subr.mxu0 %v707
    %753 = vmatpush1.msra.mxu0 %v706
    %754 = vmatprep.subr.mxu0 0.0
    %755 = vmatpush1.msra.mxu0 0.0
    %756 = vmatprep.subr.mxu0 0.0
    %757 = vmatpush1.msra.mxu0 0.0
    %758 = vmatprep.subr.mxu0 0.0
    %759 = vmatpush1.msra.mxu0 0.0
    %760 = vmatprep.subr.mxu0 0.0
    %761 = vmatpush1.msra.mxu0 0.0
    %762 = vmatprep.subr.mxu0 0.0
    %763 = vmatpush1.msra.mxu0 0.0
    %764 = vmatprep.subr.mxu0 0.0
    %765 = vmatpush1.msra.mxu0 0.0
    %766 = vmatprep.subr.mxu0 0.0
    %767 = vmatpush1.msra.mxu0 0.0
    %768 = vmatprep.subr.mxu0 0.0
    %769 = vmatpush1.msra.mxu0 0.0
    %770 = vmatprep.subr.mxu0 0.0
    %771 = vmatpush1.msra.mxu0 0.0
    %772 = vmatprep.subr.mxu0 0.0
    %773 = vmatpush1.msra.mxu0 0.0
    %774 = vmatprep.subr.mxu0 0.0
    %775 = vmatpush1.msra.mxu0 0.0
    %776 = vmatprep.subr.mxu0 0.0
    %777 = vmatpush1.msra.mxu0 0.0
    %778 = vmatprep.subr.mxu0 0.0
    %779 = vmatpush1.msra.mxu0 0.0
    %780 = vmatprep.subr.mxu0 0.0
    %781 = vmatpush1.msra.mxu0 0.0
    %782 = vmatprep.subr.mxu0 0.0
    %783 = vmatpush1.msra.mxu0 0.0
    %784 = vmatprep.subr.mxu0 0.0
    %785 = vmatpush1.msra.mxu0 0.0
    %786 = vmatprep.subr.mxu0 0.0
    %787 = vmatpush1.msra.mxu0 0.0
    %788 = vmatprep.subr.mxu0 0.0
    %789 = vmatpush1.msra.mxu0 0.0
    %790 = vmatprep.subr.mxu0 0.0
    %791 = vmatpush1.msra.mxu0 0.0
    %792 = vmatprep.subr.mxu0 0.0
    %793 = vmatpush1.msra.mxu0 0.0
    %794 = vmatprep.subr.mxu0 0.0
    %795 = vmatpush1.msra.mxu0 0.0
    %796 = vmatprep.subr.mxu0 0.0
    %797 = vmatpush1.msra.mxu0 0.0
    %798 = vmatprep.subr.mxu0 0.0
    %799 = vmatpush1.msra.mxu0 0.0
    %800 = vmatprep.subr.mxu0 0.0
    %801 = vmatpush1.msra.mxu0 0.0
    %802 = vmatprep.subr.mxu0 0.0
    %803 = vmatpush1.msra.mxu0 0.0
    %804 = vmatprep.subr.mxu0 0.0
    %805 = vmatpush1.msra.mxu0 0.0
    %806 = vmatprep.subr.mxu0 0.0
    %807 = vmatpush1.msra.mxu0 0.0
    %808 = vmatprep.subr.mxu0 0.0
    %809 = vmatpush1.msra.mxu0 0.0
    %810 = vmatprep.subr.mxu0 0.0
    %811 = vmatpush1.msra.mxu0 0.0
    %812 = vmatprep.subr.mxu0 0.0
    %813 = vmatpush1.msra.mxu0 0.0
    %814 = vmatprep.mubr.f32.mxu0 0.0
    %815 = vmatmul.mubr.f32.gmra.mrb[0].mxu0 %v739
    %v816 = vpop.f32.mrb[0].mxu0
    %v817 = vadd.f32 %v721, %v816
    %v818 = vpop.f32.mrb[0].mxu0
    %v819 = vadd.f32 %v721, %v818
    %820 = vmatprep.mubr.f32.mxu0 0.0
    %821 = vmatmul.mubr.f32.gmra.mrb[0].mxu0 %v742
    %v822 = vpop.f32.mrb[0].mxu0
    %v823 = vadd.f32 %v726, %v822
    %v824 = vpop.f32.mrb[0].mxu0
    %v825 = vadd.f32 %v726, %v824
    %826 = vmatprep.mubr.f32.mxu0 0.0
    %827 = vmatmul.mubr.f32.gmra.mrb[0].mxu0 %v745
    %v828 = vpop.f32.mrb[0].mxu0
    %v829 = vadd.f32 %v731, %v828
    %v830 = vpop.f32.mrb[0].mxu0
    %v831 = vadd.f32 %v731, %v830
    %832 = vmatprep.mubr.f32.mxu0 0.0
    %833 = vmatmul.mubr.f32.gmra.mrb[0].mxu0 %v748
    %v834 = vpop.f32.mrb[0].mxu0
    %v835 = vadd.f32 %v736, %v834
    %v836 = vpop.f32.mrb[0].mxu0
    %v837 = vadd.f32 %v736, %v836
    %838 = vdwg.mxu0
    %839 = vmatprep.subr.mxu0 %v705
    %840 = vmatpush1.msra.mxu0 %v704
    %841 = vmatprep.subr.mxu0 %v709
    %842 = vmatpush1.msra.mxu0 %v708
    %843 = vmatprep.subr.mxu0 0.0
    %844 = vmatpush1.msra.mxu0 0.0
    %845 = vmatprep.subr.mxu0 0.0
    %846 = vmatpush1.msra.mxu0 0.0
    %847 = vmatprep.subr.mxu0 0.0
    %848 = vmatpush1.msra.mxu0 0.0
    %849 = vmatprep.subr.mxu0 0.0
    %850 = vmatpush1.msra.mxu0 0.0
    %851 = vmatprep.subr.mxu0 0.0
    %852 = vmatpush1.msra.mxu0 0.0
    %853 = vmatprep.subr.mxu0 0.0
    %854 = vmatpush1.msra.mxu0 0.0
    %855 = vmatprep.subr.mxu0 0.0
    %856 = vmatpush1.msra.mxu0 0.0
    %857 = vmatprep.subr.mxu0 0.0
    %858 = vmatpush1.msra.mxu0 0.0
    %859 = vmatprep.subr.mxu0 0.0
    %860 = vmatpush1.msra.mxu0 0.0
    %861 = vmatprep.subr.mxu0 0.0
    %862 = vmatpush1.msra.mxu0 0.0
    %863 = vmatprep.subr.mxu0 0.0
    %864 = vmatpush1.msra.mxu0 0.0
    %865 = vmatprep.subr.mxu0 0.0
    %866 = vmatpush1.msra.mxu0 0.0
    %867 = vmatprep.subr.mxu0 0.0
    %868 = vmatpush1.msra.mxu0 0.0
    %869 = vmatprep.subr.mxu0 0.0
    %870 = vmatpush1.msra.mxu0 0.0
    %871 = vmatprep.subr.mxu0 0.0
    %872 = vmatpush1.msra.mxu0 0.0
    %873 = vmatprep.subr.mxu0 0.0
    %874 = vmatpush1.msra.mxu0 0.0
    %875 = vmatprep.subr.mxu0 0.0
    %876 = vmatpush1.msra.mxu0 0.0
    %877 = vmatprep.subr.mxu0 0.0
    %878 = vmatpush1.msra.mxu0 0.0
    %879 = vmatprep.subr.mxu0 0.0
    %880 = vmatpush1.msra.mxu0 0.0
    %881 = vmatprep.subr.mxu0 0.0
    %882 = vmatpush1.msra.mxu0 0.0
    %883 = vmatprep.subr.mxu0 0.0
    %884 = vmatpush1.msra.mxu0 0.0
    %885 = vmatprep.subr.mxu0 0.0
    %886 = vmatpush1.msra.mxu0 0.0
    %887 = vmatprep.subr.mxu0 0.0
    %888 = vmatpush1.msra.mxu0 0.0
    %889 = vmatprep.subr.mxu0 0.0
    %890 = vmatpush1.msra.mxu0 0.0
    %891 = vmatprep.subr.mxu0 0.0
    %892 = vmatpush1.msra.mxu0 0.0
    %893 = vmatprep.subr.mxu0 0.0
    %894 = vmatpush1.msra.mxu0 0.0
    %895 = vmatprep.subr.mxu0 0.0
    %896 = vmatpush1.msra.mxu0 0.0
    %897 = vmatprep.subr.mxu0 0.0
    %898 = vmatpush1.msra.mxu0 0.0
    %899 = vmatprep.subr.mxu0 0.0
    %900 = vmatpush1.msra.mxu0 0.0
    %901 = vmatprep.subr.mxu0 0.0
    %902 = vmatpush1.msra.mxu0 0.0
    %903 = vmatprep.mubr.f32.mxu0 0.0
    %904 = vmatmul.mubr.f32.gmra.mrb[0].mxu0 %v739
    %v905 = vpop.f32.mrb[0].mxu0
    %v906 = vadd.f32 %v721, %v905
    %v907 = vpop.f32.mrb[0].mxu0
    %v908 = vadd.f32 %v721, %v907
    %909 = vmatprep.mubr.f32.mxu0 0.0
    %910 = vmatmul.mubr.f32.gmra.mrb[0].mxu0 %v742
    %v911 = vpop.f32.mrb[0].mxu0
    %v912 = vadd.f32 %v726, %v911
    %v913 = vpop.f32.mrb[0].mxu0
    %v914 = vadd.f32 %v726, %v913
    %915 = vmatprep.mubr.f32.mxu0 0.0
    %916 = vmatmul.mubr.f32.gmra.mrb[0].mxu0 %v745
    %v917 = vpop.f32.mrb[0].mxu0
    %v918 = vadd.f32 %v731, %v917
    %v919 = vpop.f32.mrb[0].mxu0
    %v920 = vadd.f32 %v731, %v919
    %921 = vmatprep.mubr.f32.mxu0 0.0
    %922 = vmatmul.mubr.f32.gmra.mrb[0].mxu0 %v748
    %v923 = vpop.f32.mrb[0].mxu0
    %v924 = vadd.f32 %v736, %v923
    %v925 = vpop.f32.mrb[0].mxu0
    %v926 = vadd.f32 %v736, %v925
    %927 = vdwg.mxu0
    %v928 = vmax.f32 %v817, 0.0
    %v929 = vmax.f32 %v819, 0.0
    %v930 = vmax.f32 %v906, 0.0
    %v931 = vmax.f32 %v908, 0.0
    %v932 = vmax.f32 %v823, 0.0
    %v933 = vmax.f32 %v825, 0.0
    %v934 = vmax.f32 %v912, 0.0
    %v935 = vmax.f32 %v914, 0.0
    %v936 = vmax.f32 %v829, 0.0
    %v937 = vmax.f32 %v831, 0.0
    %v938 = vmax.f32 %v918, 0.0
    %v939 = vmax.f32 %v920, 0.0
    %v940 = vmax.f32 %v835, 0.0
    %v941 = vmax.f32 %v837, 0.0
    %v942 = vmax.f32 %v924, 0.0
    %v943 = vmax.f32 %v926, 0.0
    %v944 = vld [vmem:[%s7] sm:$0xff]
    %v945 = vld [vmem:[%s14] sm:$0xff]
    %947 = vset.pattern.permute.xlu0 0
    %948 = vperm.xlu0 %947, %v945
    %v949 = vpop.permute.xlu0 %948
    %v952 = vsel %vm351, %v944, 0
    %954 = vmatprep.subr.mxu0 %v929
    %955 = vmatpush1.msra.mxu0 %v928
    %956 = vmatprep.subr.mxu0 %v933
    %957 = vmatpush1.msra.mxu0 %v932
    %958 = vmatprep.subr.mxu0 0.0
    %959 = vmatpush1.msra.mxu0 0.0
    %960 = vmatprep.subr.mxu0 0.0
    %961 = vmatpush1.msra.mxu0 0.0
    %962 = vmatprep.subr.mxu0 0.0
    %963 = vmatpush1.msra.mxu0 0.0
    %964 = vmatprep.subr.mxu0 0.0
    %965 = vmatpush1.msra.mxu0 0.0
    %966 = vmatprep.subr.mxu0 0.0
    %967 = vmatpush1.msra.mxu0 0.0
    %968 = vmatprep.subr.mxu0 0.0
    %969 = vmatpush1.msra.mxu0 0.0
    %970 = vmatprep.subr.mxu0 0.0
    %971 = vmatpush1.msra.mxu0 0.0
    %972 = vmatprep.subr.mxu0 0.0
    %973 = vmatpush1.msra.mxu0 0.0
    %974 = vmatprep.subr.mxu0 0.0
    %975 = vmatpush1.msra.mxu0 0.0
    %976 = vmatprep.subr.mxu0 0.0
    %977 = vmatpush1.msra.mxu0 0.0
    %978 = vmatprep.subr.mxu0 0.0
    %979 = vmatpush1.msra.mxu0 0.0
    %980 = vmatprep.subr.mxu0 0.0
    %981 = vmatpush1.msra.mxu0 0.0
    %982 = vmatprep.subr.mxu0 0.0
    %983 = vmatpush1.msra.mxu0 0.0
    %984 = vmatprep.subr.mxu0 0.0
    %985 = vmatpush1.msra.mxu0 0.0
    %986 = vmatprep.subr.mxu0 0.0
    %987 = vmatpush1.msra.mxu0 0.0
    %988 = vmatprep.subr.mxu0 0.0
    %989 = vmatpush1.msra.mxu0 0.0
    %990 = vmatprep.subr.mxu0 0.0
    %991 = vmatpush1.msra.mxu0 0.0
    %992 = vmatprep.subr.mxu0 0.0
    %993 = vmatpush1.msra.mxu0 0.0
    %994 = vmatprep.subr.mxu0 0.0
    %995 = vmatpush1.msra.mxu0 0.0
    %996 = vmatprep.subr.mxu0 0.0
    %997 = vmatpush1.msra.mxu0 0.0
    %998 = vmatprep.subr.mxu0 0.0
    %999 = vmatpush1.msra.mxu0 0.0
    %1000 = vmatprep.subr.mxu0 0.0
    %1001 = vmatpush1.msra.mxu0 0.0
    %1002 = vmatprep.subr.mxu0 0.0
    %1003 = vmatpush1.msra.mxu0 0.0
    %1004 = vmatprep.subr.mxu0 0.0
    %1005 = vmatpush1.msra.mxu0 0.0
    %1006 = vmatprep.subr.mxu0 0.0
    %1007 = vmatpush1.msra.mxu0 0.0
    %1008 = vmatprep.subr.mxu0 0.0
    %1009 = vmatpush1.msra.mxu0 0.0
    %1010 = vmatprep.subr.mxu0 0.0
    %1011 = vmatpush1.msra.mxu0 0.0
    %1012 = vmatprep.subr.mxu0 0.0
    %1013 = vmatpush1.msra.mxu0 0.0
    %1014 = vmatprep.subr.mxu0 0.0
    %1015 = vmatpush1.msra.mxu0 0.0
    %1016 = vmatprep.subr.mxu0 0.0
    %1017 = vmatpush1.msra.mxu0 0.0
    %1018 = vmatprep.mubr.f32.mxu0 0.0
    %1019 = vmatmul.mubr.f32.gmra.mrb[0].mxu0 %v952
    %v1020 = vpop.f32.mrb[0].mxu0
    %v1021 = vpop.f32.mrb[0].mxu0
    %v1022 = vadd.f32 %v949, %v1021
    %1023 = vdwg.mxu0
    %1024 = vmatprep.subr.mxu0 %v931
    %1025 = vmatpush1.msra.mxu0 %v930
    %1026 = vmatprep.subr.mxu0 %v935
    %1027 = vmatpush1.msra.mxu0 %v934
    %1028 = vmatprep.subr.mxu0 0.0
    %1029 = vmatpush1.msra.mxu0 0.0
    %1030 = vmatprep.subr.mxu0 0.0
    %1031 = vmatpush1.msra.mxu0 0.0
    %1032 = vmatprep.subr.mxu0 0.0
    %1033 = vmatpush1.msra.mxu0 0.0
    %1034 = vmatprep.subr.mxu0 0.0
    %1035 = vmatpush1.msra.mxu0 0.0
    %1036 = vmatprep.subr.mxu0 0.0
    %1037 = vmatpush1.msra.mxu0 0.0
    %1038 = vmatprep.subr.mxu0 0.0
    %1039 = vmatpush1.msra.mxu0 0.0
    %1040 = vmatprep.subr.mxu0 0.0
    %1041 = vmatpush1.msra.mxu0 0.0
    %1042 = vmatprep.subr.mxu0 0.0
    %1043 = vmatpush1.msra.mxu0 0.0
    %1044 = vmatprep.subr.mxu0 0.0
    %1045 = vmatpush1.msra.mxu0 0.0
    %1046 = vmatprep.subr.mxu0 0.0
    %1047 = vmatpush1.msra.mxu0 0.0
    %1048 = vmatprep.subr.mxu0 0.0
    %1049 = vmatpush1.msra.mxu0 0.0
    %1050 = vmatprep.subr.mxu0 0.0
    %1051 = vmatpush1.msra.mxu0 0.0
    %1052 = vmatprep.subr.mxu0 0.0
    %1053 = vmatpush1.msra.mxu0 0.0
    %1054 = vmatprep.subr.mxu0 0.0
    %1055 = vmatpush1.msra.mxu0 0.0
    %1056 = vmatprep.subr.mxu0 0.0
    %1057 = vmatpush1.msra.mxu0 0.0
    %1058 = vmatprep.subr.mxu0 0.0
    %1059 = vmatpush1.msra.mxu0 0.0
    %1060 = vmatprep.subr.mxu0 0.0
    %1061 = vmatpush1.msra.mxu0 0.0
    %1062 = vmatprep.subr.mxu0 0.0
    %1063 = vmatpush1.msra.mxu0 0.0
    %1064 = vmatprep.subr.mxu0 0.0
    %1065 = vmatpush1.msra.mxu0 0.0
    %1066 = vmatprep.subr.mxu0 0.0
    %1067 = vmatpush1.msra.mxu0 0.0
    %1068 = vmatprep.subr.mxu0 0.0
    %1069 = vmatpush1.msra.mxu0 0.0
    %1070 = vmatprep.subr.mxu0 0.0
    %1071 = vmatpush1.msra.mxu0 0.0
    %1072 = vmatprep.subr.mxu0 0.0
    %1073 = vmatpush1.msra.mxu0 0.0
    %1074 = vmatprep.subr.mxu0 0.0
    %1075 = vmatpush1.msra.mxu0 0.0
    %1076 = vmatprep.subr.mxu0 0.0
    %1077 = vmatpush1.msra.mxu0 0.0
    %1078 = vmatprep.subr.mxu0 0.0
    %1079 = vmatpush1.msra.mxu0 0.0
    %1080 = vmatprep.subr.mxu0 0.0
    %1081 = vmatpush1.msra.mxu0 0.0
    %1082 = vmatprep.subr.mxu0 0.0
    %1083 = vmatpush1.msra.mxu0 0.0
    %1084 = vmatprep.subr.mxu0 0.0
    %1085 = vmatpush1.msra.mxu0 0.0
    %1086 = vmatprep.subr.mxu0 0.0
    %1087 = vmatpush1.msra.mxu0 0.0
    %1088 = vmatprep.mubr.f32.mxu0 0.0
    %1089 = vmatmul.mubr.f32.gmra.mrb[0].mxu0 %v952
    %v1090 = vpop.f32.mrb[0].mxu0
    %v1091 = vadd.f32 %v949, %v1090
    %v1092 = vpop.f32.mrb[0].mxu0
    %1093 = vdwg.mxu0
    %v1094 = vld [vmem:[%s8] sm:$0xff]
    %v1095 = vld [vmem:[%s8 + $0x8] sm:$0xff]
    %1097 = vset.pattern.permute.xlu0 0
    %1098 = vperm.xlu0 %1097, %v1094
    %v1099 = vpop.permute.xlu0 %1098
    %1102 = vset.pattern.permute.xlu0 0
    %1103 = vperm.xlu0 %1102, %v1095
    %v1104 = vpop.permute.xlu0 %1103
    %v1106 = vmul.f32 %v936, %v1099
    %v1107 = vmul.f32 %v937, %v1099
    %v1108 = vmul.f32 %v938, %v1099
    %v1109 = vmul.f32 %v939, %v1099
    %v1110 = vmul.f32 %v940, %v1104
    %v1111 = vmul.f32 %v941, %v1104
    %v1112 = vmul.f32 %v942, %v1104
    %v1113 = vmul.f32 %v943, %v1104
    %v1114 = vadd.f32 %v1106, %v1110
    %v1115 = vrot.slane %v1114, 4
    %v1116 = vadd.f32 %v1114, %v1115
    %v1117 = vrot.slane %v1116, 2
    %v1118 = vadd.f32 %v1116, %v1117
    %v1119 = vrot.slane %v1118, 1
    %v1120 = vadd.f32 %v1118, %v1119
    %v1121 = vadd.f32 %v1107, %v1111
    %v1122 = vrot.slane %v1121, 4
    %v1123 = vadd.f32 %v1121, %v1122
    %v1124 = vrot.slane %v1123, 2
    %v1125 = vadd.f32 %v1123, %v1124
    %v1126 = vrot.slane %v1125, 1
    %v1127 = vadd.f32 %v1125, %v1126
    %v1128 = vadd.f32 %v1108, %v1112
    %v1129 = vrot.slane %v1128, 4
    %v1130 = vadd.f32 %v1128, %v1129
    %v1131 = vrot.slane %v1130, 2
    %v1132 = vadd.f32 %v1130, %v1131
    %v1133 = vrot.slane %v1132, 1
    %v1134 = vadd.f32 %v1132, %v1133
    %v1135 = vadd.f32 %v1109, %v1113
    %v1136 = vrot.slane %v1135, 4
    %v1137 = vadd.f32 %v1135, %v1136
    %v1138 = vrot.slane %v1137, 2
    %v1139 = vadd.f32 %v1137, %v1138
    %v1140 = vrot.slane %v1139, 1
    %v1141 = vadd.f32 %v1139, %v1140
    %v1142 = vld [vmem:[#allocation2] sm:$0x1]
    %1144 = vset.pattern.permute.xlu0 0
    %1145 = vperm.xlu0 %1144, %v1142
    %v1146 = vpop.permute.xlu0 %1145
    %v1148 = vlaneseq
    %v1149 = vshrl.u32 %v1148, 7
    %v1150 = vsub.s32 0, %v1149
    %v1151 = vrot.slane %v1146, %v1150
    %v1152 = vadd.f32 %v1120, %v1151
    %v1153 = vadd.f32 %v1127, %v1151
    %v1154 = vadd.f32 %v1134, %v1151
    %v1155 = vadd.f32 %v1141, %v1151
    %v1156 = vmax.f32 %v1152, %v1153
    %v1157 = vsub.f32 %v1152, %v1156
    %v1158 = vmul.f32 %v1157, 1.442695
    %v1159 = vpow.pop %v1158
    %v1160 = vmul.f32 %v1159, %v178
    %v1161 = vsub.f32 %v1153, %v1156
    %v1162 = vmul.f32 %v1161, 1.442695
    %v1163 = vpow.pop %v1162
    %v1164 = vmul.f32 %v186, %v1022
    %v1165 = vmul.f32 %v1163, %v1164
    %v1166 = vadd.f32 %v1160, %v1165
    %v1167 = vadd.f32 %v1159, %v1163
    %v1168 = vrcp.pop %v1167
    %v1169 = vmul.f32 %v1167, %v1168
    %v1170 = vsub.f32 2.0, %v1169
    %v1171 = vmul.f32 %v1168, %v1170
    %v1172 = vmul.f32 %v1166, %v1171
    %v1173 = vadd.f32 %v1172, %v56
    %v1174 = vmax.f32 %v1154, %v1155
    %v1175 = vsub.f32 %v1154, %v1174
    %v1176 = vmul.f32 %v1175, 1.442695
    %v1177 = vpow.pop %v1176
    %v1178 = vmul.f32 %v184, %v1091
    %v1179 = vmul.f32 %v1177, %v1178
    %v1180 = vsub.f32 %v1155, %v1174
    %v1181 = vmul.f32 %v1180, 1.442695
    %v1182 = vpow.pop %v1181
    %v1183 = vmul.f32 %v1182, %v180
    %v1184 = vadd.f32 %v1179, %v1183
    %v1185 = vadd.f32 %v1177, %v1182
    %v1186 = vrcp.pop %v1185
    %v1187 = vmul.f32 %v1185, %v1186
    %v1188 = vsub.f32 2.0, %v1187
    %v1189 = vmul.f32 %v1186, %v1188
    %v1190 = vmul.f32 %v1184, %v1189
    %v1191 = vadd.f32 %v1190, %v58
    %1192 = vst [vmem:[#allocation3] sm:$0xff] %v1173
    %1193 = vst [vmem:[#allocation3 + $0x8] sm:$0xff] %v1191
    // Predicated region
    $region66: #{tpu_custom_call.1} parent=1 // pred_check
      _
    $region67: #{tpu_custom_call.1} parent=1 // pred_check_branch
      %1195 = sbr.rel (0) target = $region69
    $region68: #{tpu_custom_call.1} parent=1 // pred_region
      %s1197 = ssub.s32 256, 256
      %1198 = vsyncadd [#allocation4], %s1197
      %s1199 = sshll.u32 [#allocation3], 4
      %s1200 = int_to_ptr.vmem [resolvable:$true] %s1199
      %1205 = dma.vmem_to_hbm [thread:$0]  %s1200, 256, %s16, [#allocation4], 128, 128, 8
    $region69: #{tpu_custom_call.1} parent=1 // pred_fallthru
      _
    // Predicated region
    $region70: #{tpu_custom_call.1} parent=1 // pred_check
      _
    $region71: #{tpu_custom_call.1} parent=1 // pred_check_branch
      %1207 = sbr.rel (0) target = $region73
    $region72: #{tpu_custom_call.1} parent=1 // pred_region
      %1208 = dma.done [#allocation4], 256
    $region73: #{tpu_custom_call.1} parent=1 // pred_fallthru
      _
    %1209 = vsyncpa [#allocation4], 1

</llo_original>
